<compile_context>
chip_gen: v5e
topology: v5e:2x2
jax: 0.10.0
libtpu: 0.0.40
codegen_flags: <defaults>
</compile_context>

<pallas_src>
import functools

import jax
import jax.numpy as jnp
from jax.experimental import pallas as pl
from jax.experimental.pallas import tpu as pltpu

_NEG = -1e30  # finite "minus infinity" for padded class columns


def _round_up(v, m):
    return ((v + m - 1) // m) * m


# ----------------------------------------------------------------------------
# Fused kernel: conv1+ReLU -> conv2+ReLU -> global_add_pool -> lin_class
#               -> log_softmax.  A is streamed; everything else VMEM-resident.
# ----------------------------------------------------------------------------
def fused_resgcn_kernel(a_ref, x_ref, w1_ref, b1_ref, w2_ref, b2_ref,
                        wc_ref, bc_ref, seg_ref,
                        pooled_ref, logits_ref, logp_ref,
                        xw_ref, h1_ref, acc_ref, pool_acc_ref):
    f32, bf16 = jnp.float32, jnp.bfloat16
    layer = pl.program_id(0)           # 0: conv1, 1: conv2(+pool+classifier)
    i = pl.program_id(1)               # output row tile of A @ XW
    k = pl.program_id(2)               # contraction tile
    ni = pl.num_programs(1)
    nk = pl.num_programs(2)
    tm, tk = a_ref.shape
    n_graphs = pool_acc_ref.shape[0]

    layer_start = jnp.logical_and(i == 0, k == 0)

    # ---- once per layer: (re)compute the resident node-feature product ----
    @pl.when(jnp.logical_and(layer_start, layer == 0))
    def _():
        xw_ref[...] = jnp.dot(x_ref[...], w1_ref[...],
                              preferred_element_type=f32).astype(bf16)

    @pl.when(jnp.logical_and(layer_start, layer == 1))
    def _():
        xw_ref[...] = jnp.dot(h1_ref[...], w2_ref[...],
                              preferred_element_type=f32).astype(bf16)
        pool_acc_ref[...] = jnp.zeros_like(pool_acc_ref)

    # ---- contraction: acc[row tile] += A[i,k] @ XW[k tile]  (bf16 MXU) ----
    @pl.when(k == 0)
    def _():
        acc_ref[...] = jnp.zeros_like(acc_ref)

    koff = pl.multiple_of(k * tk, tk)
    acc_ref[...] += jnp.dot(a_ref[...], xw_ref[pl.ds(koff, tk), :],
                            preferred_element_type=f32)

    # ---- finalize row tile: bias + ReLU; layer 1 also pools ----
    last_k = k == nk - 1

    @pl.when(jnp.logical_and(last_k, layer == 0))
    def _():
        ioff = pl.multiple_of(i * tm, tm)
        h1_ref[pl.ds(ioff, tm), :] = jnp.maximum(
            acc_ref[...] + b1_ref[...], 0.0).astype(bf16)

    @pl.when(jnp.logical_and(last_k, layer == 1))
    def _():
        h2 = jnp.maximum(acc_ref[...] + b2_ref[...], 0.0).astype(bf16)
        # One-hot segment matrix for this row tile: built once per row tile
        # (outside the k loop).  Padded nodes carry id -1 -> all-zero column,
        # so they never contribute to the pooled sums.
        gid = jax.lax.broadcasted_iota(jnp.int32, (n_graphs, tm), 0)
        pool = (seg_ref[...] == gid).astype(bf16)
        pool_acc_ref[...] += jnp.dot(pool, h2, preferred_element_type=f32)

    # ---- very last grid step: classifier + log_softmax on pooled graphs ----
    @pl.when(jnp.logical_and(jnp.logical_and(layer == 1, i == ni - 1), last_k))
    def _():
        pooled = pool_acc_ref[...]
        pooled_ref[...] = pooled
        # Padded class columns: Wc cols are zero and bias is -1e30, so they
        # never win the max and exp() underflows to 0 in the logsumexp.
        logits = jnp.dot(pooled.astype(bf16), wc_ref[...],
                         preferred_element_type=f32) + bc_ref[...]
        logits_ref[...] = logits
        m = jnp.max(logits, axis=-1, keepdims=True)
        z = logits - m
        lse = jnp.log(jnp.sum(jnp.exp(z), axis=-1, keepdims=True))
        logp_ref[...] = z - lse


def res_gcn_forward(x, a_norm, batch, params, *, num_graphs, num_classes):
    n = a_norm.shape[0]
    f_in = x.shape[1]
    hidden = params["w1"].shape[1]
    f32, bf16 = jnp.float32, jnp.bfloat16

    # ---- lane/sublane-aligned padding & tile sizes ----
    tile = 256 if n > 128 else 128      # 256-wide M/K tiles fill the 256x256
    n_pad = _round_up(n, tile)          # MXU on v6e/v7x; 128 suffices on v5e
    tm = tk = tile
    g_pad = _round_up(max(num_graphs, 8), 8)
    c_pad = _round_up(max(num_classes, 128), 128)

    # Padded operands (cast fused into the padding producers; A arrives bf16
    # already from build_normalized_adjacency).
    a_p = jnp.zeros((n_pad, n_pad), bf16).at[:n, :n].set(a_norm.astype(bf16))
    x_p = jnp.zeros((n_pad, f_in), bf16).at[:n, :].set(x.astype(bf16))
    seg = jnp.full((1, n_pad), -1, jnp.int32).at[0, :n].set(
        batch.astype(jnp.int32))

    w1 = params["w1"].astype(bf16)
    w2 = params["w2"].astype(bf16)
    b1 = params["b1"].reshape(1, hidden).astype(f32)
    b2 = params["b2"].reshape(1, hidden).astype(f32)
    wc = jnp.zeros((hidden, c_pad), bf16).at[:, :num_classes].set(
        params["wc"].astype(bf16))
    bc = jnp.full((1, c_pad), _NEG, f32).at[0, :num_classes].set(
        params["bc"].astype(f32))

    grid = (2, n_pad // tm, n_pad // tk)     # (layer, row tile, k tile)

    in_specs = [
        pl.BlockSpec((tm, tk), lambda l, i, k: (i, k)),          # A (streamed)
        pl.BlockSpec((n_pad, f_in), lambda l, i, k: (0, 0)),     # X (resident)
        pl.BlockSpec((f_in, hidden), lambda l, i, k: (0, 0)),    # W1
        pl.BlockSpec((1, hidden), lambda l, i, k: (0, 0)),       # b1
        pl.BlockSpec((hidden, hidden), lambda l, i, k: (0, 0)),  # W2
        pl.BlockSpec((1, hidden), lambda l, i, k: (0, 0)),       # b2
        pl.BlockSpec((hidden, c_pad), lambda l, i, k: (0, 0)),   # Wc (padded)
        pl.BlockSpec((1, c_pad), lambda l, i, k: (0, 0)),        # bc (padded)
        pl.BlockSpec((1, tm), lambda l, i, k: (0, i)),           # batch ids
    ]
    out_specs = (
        pl.BlockSpec((g_pad, hidden), lambda l, i, k: (0, 0)),   # pooled
        pl.BlockSpec((g_pad, c_pad), lambda l, i, k: (0, 0)),    # logits
        pl.BlockSpec((g_pad, c_pad), lambda l, i, k: (0, 0)),    # log-probs
    )
    out_shape = (
        jax.ShapeDtypeStruct((g_pad, hidden), f32),
        jax.ShapeDtypeStruct((g_pad, c_pad), f32),
        jax.ShapeDtypeStruct((g_pad, c_pad), f32),
    )
    scratch_shapes = [
        pltpu.VMEM((n_pad, hidden), bf16),    # XW of the current layer
        pltpu.VMEM((n_pad, hidden), bf16),    # h1 (layer-0 activations)
        pltpu.VMEM((tm, hidden), f32),        # per-row-tile accumulator
        pltpu.VMEM((g_pad, hidden), f32),     # pooled-sum accumulator
    ]

    # VMEM footprint estimate (2x covers double-buffered pipelined operands).
    vmem_bytes = (
        2 * tm * tk * 2                                   # A tile, 2 buffers
        + n_pad * f_in * 2                                # X resident
        + (f_in * hidden + hidden * hidden + hidden * c_pad) * 2  # weights
        + (2 * hidden + c_pad) * 4                        # biases
        + 2 * tm * 4                                      # seg tiles
        + 2 * n_pad * hidden * 2                          # xw + h1 scratch
        + tm * hidden * 4                                 # acc scratch
        + g_pad * hidden * 4                              # pooled acc
        + g_pad * (hidden + 2 * c_pad) * 4                # outputs
    )
    vmem_limit = int(min(max(2 * vmem_bytes, 16 * 2**20), 64 * 2**20))

    flops = (2 * n_pad * f_in * hidden           # X @ W1
             + 2 * n_pad * hidden * hidden       # h1 @ W2
             + 2 * 2 * n_pad * n_pad * hidden    # two A @ XW products
             + 2 * g_pad * n_pad * hidden        # pooling
             + 2 * g_pad * hidden * c_pad)       # classifier
    bytes_accessed = (2 * n_pad * n_pad * 2      # A streamed twice (bf16)
                      + n_pad * f_in * 2
                      + (f_in + hidden + c_pad) * hidden * 2
                      + g_pad * (hidden + 2 * c_pad) * 4)

    pooled_p, logits_p, logp_p = pl.pallas_call(
        fused_resgcn_kernel,
        out_shape=out_shape,
        grid=grid,
        in_specs=in_specs,
        out_specs=out_specs,
        scratch_shapes=scratch_shapes,
        compiler_params=pltpu.CompilerParams(
            # All axes sequential: h1 / pooled accumulators live in per-core
            # scratch.  TODO(synk): two-call split for v7x 2-TC sharding.
            dimension_semantics=("arbitrary", "arbitrary", "arbitrary"),
            vmem_limit_bytes=vmem_limit),
        cost_estimate=pl.CostEstimate(flops=int(flops),
                                      transcendentals=int(g_pad * c_pad),
                                      bytes_accessed=int(bytes_accessed)),
    )(a_p, x_p, w1, b1, w2, b2, wc, bc, seg)

    pooled = pooled_p[:num_graphs]
    logits = logits_p[:num_graphs, :num_classes]
    logp = logp_p[:num_graphs, :num_classes]
    graph_representation = pooled
    hidden_representation = pooled  # dropout == 0
    return logp, graph_representation, hidden_representation, logits


# ----------------------------------------------------------------------------
# Plain-JAX preprocessing and a pure-JAX reference for validation.
# ----------------------------------------------------------------------------
def build_normalized_adjacency(edge_index, num_nodes):
    """Dense D^-1/2 (A + I) D^-1/2 built from edge_index, returned in bf16.

    Messages flow src -> dst (row = dst), duplicate edges accumulate, and a
    weight-1 self-loop is added to every node (PyG gcn_norm convention).
    bf16 is produced here so the cast fuses with the final scaling op.
    """
    src, dst = edge_index[0], edge_index[1]
    a = jnp.zeros((num_nodes, num_nodes), jnp.float32)
    a = a.at[dst, src].add(1.0)
    a = a + jnp.eye(num_nodes, dtype=jnp.float32)
    deg = jnp.sum(a, axis=1)
    d_inv_sqrt = jnp.where(deg > 0, jax.lax.rsqrt(deg), 0.0)
    return (d_inv_sqrt[:, None] * a * d_inv_sqrt[None, :]).astype(jnp.bfloat16)


def init_linear(key, fan_in, fan_out):
    kw, kb = jax.random.split(key)
    bound = 1.0 / jnp.sqrt(jnp.float32(fan_in))
    w = jax.random.uniform(kw, (fan_in, fan_out), jnp.float32, -bound, bound)
    b = jax.random.uniform(kb, (fan_out,), jnp.float32, -bound, bound)
    return w, b


def reference_forward(x, a_norm, batch, params, num_graphs):
    """f32 reference with bf16-quantized operands (matches kernel inputs)."""
    f32 = jnp.float32
    q = lambda v: v.astype(jnp.bfloat16).astype(f32)
    a = a_norm.astype(f32)
    h1 = jnp.maximum(a @ (q(x) @ q(params["w1"])) + params["b1"], 0.0)
    h2 = jnp.maximum(a @ (h1 @ q(params["w2"])) + params["b2"], 0.0)
    onehot = (batch[None, :] == jnp.arange(num_graphs)[:, None]).astype(f32)
    pooled = onehot @ h2
    logits = pooled @ q(params["wc"]) + params["bc"]
    logp = jax.nn.log_softmax(logits, axis=-1)
    return logp, pooled, logits


if __name__ == "__main__":
    key = jax.random.PRNGKey(0)
    k_x, k_e, k1, k2, kc = jax.random.split(key, 5)

    N_NODES = 64          # total nodes across the batch of graphs
    F_IN = 768            # conv1 input features (hard-coded in the module)
    HIDDEN = 128          # conv1/conv2 output = lin_class input
    NUM_GRAPHS = 8        # graphs in the batch (8 nodes each)
    NUM_CLASSES = 4       # dataset.num_classes
    NUM_EDGES = 128

    x = jax.random.normal(k_x, (N_NODES, F_IN), jnp.float32)
    edge_index = jax.random.randint(k_e, (2, NUM_EDGES), 0, N_NODES, jnp.int32)
    batch = jnp.repeat(jnp.arange(NUM_GRAPHS, dtype=jnp.int32),
                       N_NODES // NUM_GRAPHS)

    a_norm = build_normalized_adjacency(edge_index, N_NODES)

    w1, b1 = init_linear(k1, F_IN, HIDDEN)          # conv1 = GCNConv(768, 128)
    w2, b2 = init_linear(k2, HIDDEN, HIDDEN)        # conv2 = GCNConv(128, 128)
    wc, bc = init_linear(kc, HIDDEN, NUM_CLASSES)   # lin_class
    params = dict(w1=w1, b1=b1, w2=w2, b2=b2, wc=wc, bc=bc)

    fwd = jax.jit(functools.partial(res_gcn_forward,
                                    num_graphs=NUM_GRAPHS,
                                    num_classes=NUM_CLASSES))
    logp, graph_repr, hidden_repr, logits = fwd(x, a_norm, batch, params)
    jax.block_until_ready((logp, graph_repr, hidden_repr, logits))

    assert logp.shape == (NUM_GRAPHS, NUM_CLASSES)
    assert graph_repr.shape == (NUM_GRAPHS, HIDDEN)
    assert hidden_repr.shape == (NUM_GRAPHS, HIDDEN)
    assert logits.shape == (NUM_GRAPHS, NUM_CLASSES)
    assert bool(jnp.all(jnp.isfinite(logp)))

    # Validate against the pure-JAX reference (bf16 operand rounding only).
    logp_ref, pooled_ref, logits_ref = reference_forward(
        x, a_norm, batch, params, NUM_GRAPHS)
    assert bool(jnp.allclose(graph_repr, pooled_ref, atol=5e-2, rtol=5e-2))
    assert bool(jnp.allclose(logits, logits_ref, atol=5e-2, rtol=5e-2))
    assert bool(jnp.allclose(logp, logp_ref, atol=5e-2, rtol=5e-2))
    print("KERNEL_OK")
</pallas_src>

<mosaic_0001>
module attributes {stable_mosaic.version = 11 : i64} {
  func.func @fused_resgcn_kernel(%arg0: i32, %arg1: i32, %arg2: i32, %arg3: memref<128x128xbf16, #tpu.memory_space<vmem>>, %arg4: memref<128x768xbf16, #tpu.memory_space<vmem>>, %arg5: memref<768x128xbf16, #tpu.memory_space<vmem>>, %arg6: memref<1x128xf32, #tpu.memory_space<vmem>>, %arg7: memref<128x128xbf16, #tpu.memory_space<vmem>>, %arg8: memref<1x128xf32, #tpu.memory_space<vmem>>, %arg9: memref<128x128xbf16, #tpu.memory_space<vmem>>, %arg10: memref<1x128xf32, #tpu.memory_space<vmem>>, %arg11: memref<1x128xi32, #tpu.memory_space<vmem>>, %arg12: memref<8x128xf32, #tpu.memory_space<vmem>>, %arg13: memref<8x128xf32, #tpu.memory_space<vmem>>, %arg14: memref<8x128xf32, #tpu.memory_space<vmem>>, %arg15: memref<128x128xbf16, #tpu.memory_space<vmem>>, %arg16: memref<128x128xbf16, #tpu.memory_space<vmem>>, %arg17: memref<128x128xf32, #tpu.memory_space<vmem>>, %arg18: memref<8x128xf32, #tpu.memory_space<vmem>>) attributes {dimension_semantics = [#tpu.dimension_semantics<arbitrary>, #tpu.dimension_semantics<arbitrary>, #tpu.dimension_semantics<arbitrary>], iteration_bounds = array<i64: 2, 1, 1>, scalar_prefetch = 0 : i64, scratch_operands = 4 : i64, tpu.core_type = #tpu.core_type<tc>, window_params = [{transform_indices = @transform_0, window_bounds = array<i64: 128, 128>}, {pipeline_mode = #tpu.pipeline_mode<synchronous>, transform_indices = @transform_1, window_bounds = array<i64: 128, 768>}, {pipeline_mode = #tpu.pipeline_mode<synchronous>, transform_indices = @transform_2, window_bounds = array<i64: 768, 128>}, {pipeline_mode = #tpu.pipeline_mode<synchronous>, transform_indices = @transform_3, window_bounds = array<i64: 1, 128>}, {pipeline_mode = #tpu.pipeline_mode<synchronous>, transform_indices = @transform_4, window_bounds = array<i64: 128, 128>}, {pipeline_mode = #tpu.pipeline_mode<synchronous>, transform_indices = @transform_5, window_bounds = array<i64: 1, 128>}, {pipeline_mode = #tpu.pipeline_mode<synchronous>, transform_indices = @transform_6, window_bounds = array<i64: 128, 128>}, {pipeline_mode = #tpu.pipeline_mode<synchronous>, transform_indices = @transform_7, window_bounds = array<i64: 1, 128>}, {transform_indices = @transform_8, window_bounds = array<i64: 1, 128>}, {pipeline_mode = #tpu.pipeline_mode<synchronous>, transform_indices = @transform_9, window_bounds = array<i64: 8, 128>}, {pipeline_mode = #tpu.pipeline_mode<synchronous>, transform_indices = @transform_10, window_bounds = array<i64: 8, 128>}, {pipeline_mode = #tpu.pipeline_mode<synchronous>, transform_indices = @transform_11, window_bounds = array<i64: 8, 128>}]} {
    %c0_i32 = arith.constant 0 : i32
    %0 = arith.cmpi eq, %arg1, %c0_i32 : i32
    %c0_i32_0 = arith.constant 0 : i32
    %1 = arith.cmpi eq, %arg2, %c0_i32_0 : i32
    %2 = arith.andi %0, %1 : i1
    %c0_i32_1 = arith.constant 0 : i32
    %3 = arith.cmpi eq, %arg0, %c0_i32_1 : i32
    %4 = arith.andi %2, %3 : i1
    %5 = arith.extui %4 : i1 to i32
    %c0_i32_2 = arith.constant 0 : i32
    %6 = arith.cmpi ne, %5, %c0_i32_2 : i32
    scf.if %6 {
      %c0_20 = arith.constant 0 : index
      %c0_21 = arith.constant 0 : index
      %38 = vector.load %arg4[%c0_20, %c0_21] : memref<128x768xbf16, #tpu.memory_space<vmem>>, vector<128x768xbf16>
      %c0_22 = arith.constant 0 : index
      %c0_23 = arith.constant 0 : index
      %39 = vector.load %arg5[%c0_22, %c0_23] : memref<768x128xbf16, #tpu.memory_space<vmem>>, vector<768x128xbf16>
      %cst_24 = arith.constant dense<0.000000e+00> : vector<128x128xf32>
      %40 = tpu.matmul %38, %39, %cst_24 {dimension_numbers = #tpu.dot_dimension_numbers<[1], [0], [0], [1], [0, 0, 1, 1], [], []>} : vector<128x768xbf16>, vector<768x128xbf16>, vector<128x128xf32> -> vector<128x128xf32>
      %41 = arith.truncf %40 : vector<128x128xf32> to vector<128x128xbf16>
      %c0_25 = arith.constant 0 : index
      %c0_26 = arith.constant 0 : index
      %42 = vector.load %arg15[%c0_25, %c0_26] : memref<128x128xbf16, #tpu.memory_space<vmem>>, vector<128x128xbf16>
      tpu.vector_store %arg15[%c0_25, %c0_26], %41 {strides = array<i32>} : memref<128x128xbf16, #tpu.memory_space<vmem>>, vector<128x128xbf16>,
    } else {
    }
    %c1_i32 = arith.constant 1 : i32
    %7 = arith.cmpi eq, %arg0, %c1_i32 : i32
    %8 = arith.andi %2, %7 : i1
    %9 = arith.extui %8 : i1 to i32
    %c0_i32_3 = arith.constant 0 : i32
    %10 = arith.cmpi ne, %9, %c0_i32_3 : i32
    scf.if %10 {
      %c0_20 = arith.constant 0 : index
      %c0_21 = arith.constant 0 : index
      %38 = vector.load %arg16[%c0_20, %c0_21] : memref<128x128xbf16, #tpu.memory_space<vmem>>, vector<128x128xbf16>
      %c0_22 = arith.constant 0 : index
      %c0_23 = arith.constant 0 : index
      %39 = vector.load %arg7[%c0_22, %c0_23] : memref<128x128xbf16, #tpu.memory_space<vmem>>, vector<128x128xbf16>
      %cst_24 = arith.constant dense<0.000000e+00> : vector<128x128xf32>
      %40 = tpu.matmul %38, %39, %cst_24 {dimension_numbers = #tpu.dot_dimension_numbers<[1], [0], [0], [1], [0, 0, 1, 1], [], []>} : vector<128x128xbf16>, vector<128x128xbf16>, vector<128x128xf32> -> vector<128x128xf32>
      %41 = arith.truncf %40 : vector<128x128xf32> to vector<128x128xbf16>
      %c0_25 = arith.constant 0 : index
      %c0_26 = arith.constant 0 : index
      %42 = vector.load %arg15[%c0_25, %c0_26] : memref<128x128xbf16, #tpu.memory_space<vmem>>, vector<128x128xbf16>
      tpu.vector_store %arg15[%c0_25, %c0_26], %41 {strides = array<i32>} : memref<128x128xbf16, #tpu.memory_space<vmem>>, vector<128x128xbf16>,
      %cst_27 = arith.constant 0.000000e+00 : f32
      %43 = vector.broadcast %cst_27 : f32 to vector<8x128xf32>
      %c0_28 = arith.constant 0 : index
      %c0_29 = arith.constant 0 : index
      %44 = vector.load %arg18[%c0_28, %c0_29] : memref<8x128xf32, #tpu.memory_space<vmem>>, vector<8x128xf32>
      tpu.vector_store %arg18[%c0_28, %c0_29], %43 {strides = array<i32>} : memref<8x128xf32, #tpu.memory_space<vmem>>, vector<8x128xf32>,
    } else {
    }
    %c0_i32_4 = arith.constant 0 : i32
    %11 = arith.cmpi eq, %arg2, %c0_i32_4 : i32
    %12 = arith.extui %11 : i1 to i32
    %c0_i32_5 = arith.constant 0 : i32
    %13 = arith.cmpi ne, %12, %c0_i32_5 : i32
    scf.if %13 {
      %cst_20 = arith.constant 0.000000e+00 : f32
      %38 = vector.broadcast %cst_20 : f32 to vector<128x128xf32>
      %c0_21 = arith.constant 0 : index
      %c0_22 = arith.constant 0 : index
      %39 = vector.load %arg17[%c0_21, %c0_22] : memref<128x128xf32, #tpu.memory_space<vmem>>, vector<128x128xf32>
      tpu.vector_store %arg17[%c0_21, %c0_22], %38 {strides = array<i32>} : memref<128x128xf32, #tpu.memory_space<vmem>>, vector<128x128xf32>,
    } else {
    }
    %c128_i32 = arith.constant 128 : i32
    %14 = arith.muli %arg2, %c128_i32 : i32
    %15 = tpu.assume_multiple %14, 128 : i32
    %c0 = arith.constant 0 : index
    %c0_6 = arith.constant 0 : index
    %16 = vector.load %arg17[%c0, %c0_6] : memref<128x128xf32, #tpu.memory_space<vmem>>, vector<128x128xf32>
    %c0_7 = arith.constant 0 : index
    %c0_8 = arith.constant 0 : index
    %17 = vector.load %arg3[%c0_7, %c0_8] : memref<128x128xbf16, #tpu.memory_space<vmem>>, vector<128x128xbf16>
    %18 = arith.index_cast %15 : i32 to index
    %c0_9 = arith.constant 0 : index
    %19 = vector.load %arg15[%18, %c0_9] : memref<128x128xbf16, #tpu.memory_space<vmem>>, vector<128x128xbf16>
    %cst = arith.constant dense<0.000000e+00> : vector<128x128xf32>
    %20 = tpu.matmul %17, %19, %cst {dimension_numbers = #tpu.dot_dimension_numbers<[1], [0], [0], [1], [0, 0, 1, 1], [], []>} : vector<128x128xbf16>, vector<128x128xbf16>, vector<128x128xf32> -> vector<128x128xf32>
    %21 = arith.addf %16, %20 : vector<128x128xf32>
    %c0_10 = arith.constant 0 : index
    %c0_11 = arith.constant 0 : index
    %22 = vector.load %arg17[%c0_10, %c0_11] : memref<128x128xf32, #tpu.memory_space<vmem>>, vector<128x128xf32>
    tpu.vector_store %arg17[%c0_10, %c0_11], %21 {strides = array<i32>} : memref<128x128xf32, #tpu.memory_space<vmem>>, vector<128x128xf32>,
    %c0_i32_12 = arith.constant 0 : i32
    %23 = arith.cmpi eq, %arg2, %c0_i32_12 : i32
    %c0_i32_13 = arith.constant 0 : i32
    %24 = arith.cmpi eq, %arg0, %c0_i32_13 : i32
    %25 = arith.andi %23, %24 : i1
    %26 = arith.extui %25 : i1 to i32
    %c0_i32_14 = arith.constant 0 : i32
    %27 = arith.cmpi ne, %26, %c0_i32_14 : i32
    scf.if %27 {
      %c128_i32_20 = arith.constant 128 : i32
      %38 = arith.muli %arg1, %c128_i32_20 : i32
      %39 = tpu.assume_multiple %38, 128 : i32
      %c0_21 = arith.constant 0 : index
      %c0_22 = arith.constant 0 : index
      %40 = vector.load %arg17[%c0_21, %c0_22] : memref<128x128xf32, #tpu.memory_space<vmem>>, vector<128x128xf32>
      %c0_23 = arith.constant 0 : index
      %c0_24 = arith.constant 0 : index
      %41 = vector.load %arg6[%c0_23, %c0_24] : memref<1x128xf32, #tpu.memory_space<vmem>>, vector<1x128xf32>
      %42 = vector.broadcast %41 : vector<1x128xf32> to vector<128x128xf32>
      %43 = arith.addf %40, %42 : vector<128x128xf32>
      %cst_25 = arith.constant 0.000000e+00 : f32
      %44 = vector.broadcast %cst_25 : f32 to vector<128x128xf32>
      %45 = arith.maximumf %43, %44 : vector<128x128xf32>
      %46 = arith.truncf %45 : vector<128x128xf32> to vector<128x128xbf16>
      %47 = arith.index_cast %39 : i32 to index
      %c0_26 = arith.constant 0 : index
      %48 = vector.load %arg16[%47, %c0_26] : memref<128x128xbf16, #tpu.memory_space<vmem>>, vector<128x128xbf16>
      tpu.vector_store %arg16[%47, %c0_26], %46 {strides = array<i32>} : memref<128x128xbf16, #tpu.memory_space<vmem>>, vector<128x128xbf16>,
    } else {
    }
    %c1_i32_15 = arith.constant 1 : i32
    %28 = arith.cmpi eq, %arg0, %c1_i32_15 : i32
    %29 = arith.andi %23, %28 : i1
    %30 = arith.extui %29 : i1 to i32
    %c0_i32_16 = arith.constant 0 : i32
    %31 = arith.cmpi ne, %30, %c0_i32_16 : i32
    scf.if %31 {
      %c0_20 = arith.constant 0 : index
      %c0_21 = arith.constant 0 : index
      %38 = vector.load %arg17[%c0_20, %c0_21] : memref<128x128xf32, #tpu.memory_space<vmem>>, vector<128x128xf32>
      %c0_22 = arith.constant 0 : index
      %c0_23 = arith.constant 0 : index
      %39 = vector.load %arg8[%c0_22, %c0_23] : memref<1x128xf32, #tpu.memory_space<vmem>>, vector<1x128xf32>
      %40 = vector.broadcast %39 : vector<1x128xf32> to vector<128x128xf32>
      %41 = arith.addf %38, %40 : vector<128x128xf32>
      %cst_24 = arith.constant 0.000000e+00 : f32
      %42 = vector.broadcast %cst_24 : f32 to vector<128x128xf32>
      %43 = arith.maximumf %41, %42 : vector<128x128xf32>
      %44 = arith.truncf %43 : vector<128x128xf32> to vector<128x128xbf16>
      %45 = tpu.iota {dimensions = array<i32: 0>} : vector<8x128xi32>
      %c0_25 = arith.constant 0 : index
      %c0_26 = arith.constant 0 : index
      %46 = vector.load %arg11[%c0_25, %c0_26] : memref<1x128xi32, #tpu.memory_space<vmem>>, vector<1x128xi32>
      %47 = vector.broadcast %46 : vector<1x128xi32> to vector<8x128xi32>
      %48 = arith.cmpi eq, %47, %45 : vector<8x128xi32>
      %49 = arith.extui %48 : vector<8x128xi1> to vector<8x128xi32>
      %50 = arith.sitofp %49 : vector<8x128xi32> to vector<8x128xf32>
      %51 = arith.truncf %50 : vector<8x128xf32> to vector<8x128xbf16>
      %c0_27 = arith.constant 0 : index
      %c0_28 = arith.constant 0 : index
      %52 = vector.load %arg18[%c0_27, %c0_28] : memref<8x128xf32, #tpu.memory_space<vmem>>, vector<8x128xf32>
      %cst_29 = arith.constant dense<0.000000e+00> : vector<8x128xf32>
      %53 = tpu.matmul %51, %44, %cst_29 {dimension_numbers = #tpu.dot_dimension_numbers<[1], [0], [0], [1], [0, 0, 1, 1], [], []>} : vector<8x128xbf16>, vector<128x128xbf16>, vector<8x128xf32> -> vector<8x128xf32>
      %54 = arith.addf %52, %53 : vector<8x128xf32>
      %c0_30 = arith.constant 0 : index
      %c0_31 = arith.constant 0 : index
      %55 = vector.load %arg18[%c0_30, %c0_31] : memref<8x128xf32, #tpu.memory_space<vmem>>, vector<8x128xf32>
      tpu.vector_store %arg18[%c0_30, %c0_31], %54 {strides = array<i32>} : memref<8x128xf32, #tpu.memory_space<vmem>>, vector<8x128xf32>,
    } else {
    }
    %c1_i32_17 = arith.constant 1 : i32
    %32 = arith.cmpi eq, %arg0, %c1_i32_17 : i32
    %c0_i32_18 = arith.constant 0 : i32
    %33 = arith.cmpi eq, %arg1, %c0_i32_18 : i32
    %34 = arith.andi %32, %33 : i1
    %35 = arith.andi %34, %23 : i1
    %36 = arith.extui %35 : i1 to i32
    %c0_i32_19 = arith.constant 0 : i32
    %37 = arith.cmpi ne, %36, %c0_i32_19 : i32
    scf.if %37 {
      %c0_20 = arith.constant 0 : index
      %c0_21 = arith.constant 0 : index
      %38 = vector.load %arg18[%c0_20, %c0_21] : memref<8x128xf32, #tpu.memory_space<vmem>>, vector<8x128xf32>
      %c0_22 = arith.constant 0 : index
      %c0_23 = arith.constant 0 : index
      %39 = vector.load %arg12[%c0_22, %c0_23] : memref<8x128xf32, #tpu.memory_space<vmem>>, vector<8x128xf32>
      tpu.vector_store %arg12[%c0_22, %c0_23], %38 {strides = array<i32>} : memref<8x128xf32, #tpu.memory_space<vmem>>, vector<8x128xf32>,
      %40 = arith.truncf %38 : vector<8x128xf32> to vector<8x128xbf16>
      %c0_24 = arith.constant 0 : index
      %c0_25 = arith.constant 0 : index
      %41 = vector.load %arg9[%c0_24, %c0_25] : memref<128x128xbf16, #tpu.memory_space<vmem>>, vector<128x128xbf16>
      %cst_26 = arith.constant dense<0.000000e+00> : vector<8x128xf32>
      %42 = tpu.matmul %40, %41, %cst_26 {dimension_numbers = #tpu.dot_dimension_numbers<[1], [0], [0], [1], [0, 0, 1, 1], [], []>} : vector<8x128xbf16>, vector<128x128xbf16>, vector<8x128xf32> -> vector<8x128xf32>
      %c0_27 = arith.constant 0 : index
      %c0_28 = arith.constant 0 : index
      %43 = vector.load %arg10[%c0_27, %c0_28] : memref<1x128xf32, #tpu.memory_space<vmem>>, vector<1x128xf32>
      %44 = vector.broadcast %43 : vector<1x128xf32> to vector<8x128xf32>
      %45 = arith.addf %42, %44 : vector<8x128xf32>
      %c0_29 = arith.constant 0 : index
      %c0_30 = arith.constant 0 : index
      %46 = vector.load %arg13[%c0_29, %c0_30] : memref<8x128xf32, #tpu.memory_space<vmem>>, vector<8x128xf32>
      tpu.vector_store %arg13[%c0_29, %c0_30], %45 {strides = array<i32>} : memref<8x128xf32, #tpu.memory_space<vmem>>, vector<8x128xf32>,
      %cst_31 = arith.constant dense<0xFF800000> : vector<8xf32>
      %47 = vector.multi_reduction <maximumf>, %45, %cst_31 [1] : vector<8x128xf32> to vector<8xf32>
      %48 = vector.shape_cast %47 : vector<8xf32> to vector<8x1xf32>
      %49 = vector.broadcast %48 : vector<8x1xf32> to vector<8x128xf32>
      %50 = arith.subf %45, %49 : vector<8x128xf32>
      %51 = math.exp %50 : vector<8x128xf32>
      %cst_32 = arith.constant dense<0.000000e+00> : vector<8xf32>
      %52 = vector.multi_reduction <add>, %51, %cst_32 [1] : vector<8x128xf32> to vector<8xf32>
      %53 = vector.shape_cast %52 : vector<8xf32> to vector<8x1xf32>
      %54 = math.log %53 : vector<8x1xf32>
      %55 = vector.broadcast %54 : vector<8x1xf32> to vector<8x128xf32>
      %56 = arith.subf %50, %55 : vector<8x128xf32>
      %c0_33 = arith.constant 0 : index
      %c0_34 = arith.constant 0 : index
      %57 = vector.load %arg14[%c0_33, %c0_34] : memref<8x128xf32, #tpu.memory_space<vmem>>, vector<8x128xf32>
      tpu.vector_store %arg14[%c0_33, %c0_34], %56 {strides = array<i32>} : memref<8x128xf32, #tpu.memory_space<vmem>>, vector<8x128xf32>,
    } else {
    }
    return
  }
  func.func @transform_0(%arg0: i32, %arg1: i32, %arg2: i32) -> (i32, i32) {
    %c0_i32 = arith.constant 0 : i32
    return %arg1, %arg2 : i32, i32
  }
  func.func @transform_1(%arg0: i32, %arg1: i32, %arg2: i32) -> (i32, i32) {
    %c0_i32 = arith.constant 0 : i32
    %c0_i32_0 = arith.constant 0 : i32
    %c0_i32_1 = arith.constant 0 : i32
    return %c0_i32, %c0_i32_0 : i32, i32
  }
  func.func @transform_2(%arg0: i32, %arg1: i32, %arg2: i32) -> (i32, i32) {
    %c0_i32 = arith.constant 0 : i32
    %c0_i32_0 = arith.constant 0 : i32
    %c0_i32_1 = arith.constant 0 : i32
    return %c0_i32, %c0_i32_0 : i32, i32
  }
  func.func @transform_3(%arg0: i32, %arg1: i32, %arg2: i32) -> (i32, i32) {
    %c0_i32 = arith.constant 0 : i32
    %c0_i32_0 = arith.constant 0 : i32
    %c0_i32_1 = arith.constant 0 : i32
    return %c0_i32, %c0_i32_0 : i32, i32
  }
  func.func @transform_4(%arg0: i32, %arg1: i32, %arg2: i32) -> (i32, i32) {
    %c0_i32 = arith.constant 0 : i32
    %c0_i32_0 = arith.constant 0 : i32
    %c0_i32_1 = arith.constant 0 : i32
    return %c0_i32, %c0_i32_0 : i32, i32
  }
  func.func @transform_5(%arg0: i32, %arg1: i32, %arg2: i32) -> (i32, i32) {
    %c0_i32 = arith.constant 0 : i32
    %c0_i32_0 = arith.constant 0 : i32
    %c0_i32_1 = arith.constant 0 : i32
    return %c0_i32, %c0_i32_0 : i32, i32
  }
  func.func @transform_6(%arg0: i32, %arg1: i32, %arg2: i32) -> (i32, i32) {
    %c0_i32 = arith.constant 0 : i32
    %c0_i32_0 = arith.constant 0 : i32
    %c0_i32_1 = arith.constant 0 : i32
    return %c0_i32, %c0_i32_0 : i32, i32
  }
  func.func @transform_7(%arg0: i32, %arg1: i32, %arg2: i32) -> (i32, i32) {
    %c0_i32 = arith.constant 0 : i32
    %c0_i32_0 = arith.constant 0 : i32
    %c0_i32_1 = arith.constant 0 : i32
    return %c0_i32, %c0_i32_0 : i32, i32
  }
  func.func @transform_8(%arg0: i32, %arg1: i32, %arg2: i32) -> (i32, i32) {
    %c0_i32 = arith.constant 0 : i32
    %c0_i32_0 = arith.constant 0 : i32
    return %c0_i32, %arg1 : i32, i32
  }
  func.func @transform_9(%arg0: i32, %arg1: i32, %arg2: i32) -> (i32, i32) {
    %c0_i32 = arith.constant 0 : i32
    %c0_i32_0 = arith.constant 0 : i32
    %c0_i32_1 = arith.constant 0 : i32
    return %c0_i32, %c0_i32_0 : i32, i32
  }
  func.func @transform_10(%arg0: i32, %arg1: i32, %arg2: i32) -> (i32, i32) {
    %c0_i32 = arith.constant 0 : i32
    %c0_i32_0 = arith.constant 0 : i32
    %c0_i32_1 = arith.constant 0 : i32
    return %c0_i32, %c0_i32_0 : i32, i32
  }
  func.func @transform_11(%arg0: i32, %arg1: i32, %arg2: i32) -> (i32, i32) {
    %c0_i32 = arith.constant 0 : i32
    %c0_i32_0 = arith.constant 0 : i32
    %c0_i32_1 = arith.constant 0 : i32
    return %c0_i32, %c0_i32_0 : i32, i32
  }
}

</mosaic_0001>

<llo_original>
// kernel: res_gcn_forward.1
$region0: #{res_gcn_forward.1}
  #allocation0 [shape = 'u32[]', space=smem, size = 0x4, offset = 0x4, fixed_abs, tag = 'smem constant byte address 0x4 - core index']
  #allocation1 [shape = 'u32[72,128]{1,0:T(1,128)}', space=vmem, size = 0x9000, scoped, tag = 'internal scratch']
  #allocation2 [shape = 'bf16[128,128]{1,0:T(8,128)(2,1)}', space=vmem, size = 0x8000, scoped, tag = 'scratch operand']
  #allocation3 [shape = 'bf16[128,128]{1,0:T(8,128)(2,1)}', space=vmem, size = 0x8000, scoped, tag = 'scratch operand']
  #allocation4 [shape = 'f32[128,128]{1,0:T(8,128)}', space=vmem, size = 0x10000, scoped, tag = 'scratch operand']
  #allocation5 [shape = 'f32[8,128]{1,0:T(8,128)}', space=vmem, size = 0x1000, scoped, tag = 'scratch operand']
  %s0 = inlined_call_operand.vmem [shape: bf16[128,128], index: 0, kind: input, shape index: {}]
  %s1 = inlined_call_operand.vmem [shape: bf16[128,768], index: 1, kind: input, shape index: {}]
  %s2 = inlined_call_operand.vmem [shape: bf16[768,128], index: 2, kind: input, shape index: {}]
  %s3 = inlined_call_operand.vmem [shape: f32[1,128], index: 3, kind: input, shape index: {}]
  %s4 = inlined_call_operand.vmem [shape: bf16[128,128], index: 4, kind: input, shape index: {}]
  %s5 = inlined_call_operand.vmem [shape: f32[1,128], index: 5, kind: input, shape index: {}]
  %s6 = inlined_call_operand.vmem [shape: bf16[128,128], index: 6, kind: input, shape index: {}]
  %s7 = inlined_call_operand.vmem [shape: f32[1,128], index: 7, kind: input, shape index: {}]
  %s8 = inlined_call_operand.vmem [shape: s32[1,128], index: 8, kind: input, shape index: {}]
  %s9 = inlined_call_operand.vmem [shape: f32[8,128], index: 9, kind: output, shape index: {0}]
  %s10 = inlined_call_operand.vmem [shape: f32[8,128], index: 10, kind: output, shape index: {1}]
  %s11 = inlined_call_operand.vmem [shape: f32[8,128], index: 11, kind: output, shape index: {2}]
  %12 = xla_tuple %s9, %s10, %s11
  %s13 = sld [smem:[#allocation0]]
  $region109: #{res_gcn_forward.1} parent=0
    _
  %s15 = ssub.s32 1, %s13
  %s16 = scalar_select 0, %s15, %s13
  loop: start=0, step=1, limit=4
  $region2: #{res_gcn_forward.1} parent=0 // loop_pre_header
    _
  $region3: #{res_gcn_forward.1} parent=0 // loop_header
    %s18 = sphi 0, %s22
    %p19 = scmp.ge.s32.totalorder %s18, 4
    %s25 = sphi 0, %s44
    %s26 = sphi 0, %s40
    %s27 = sphi 0, %s36
    %s28 = sphi 0, %s25
    %s29 = sphi 0, %s26
    %s30 = sphi 0, %s27
    %s31 = sphi 0, %s28
    %s32 = sphi 0, %s29
    %s33 = sphi 0, %s30
    %s49 = sphi 0, %s51
    %s52 = sphi 0, %s49
    %s53 = sphi 0, %s52
    %s69 = sphi 0, %s53
    %s73 = sphi 0, %s73
    %s75 = sphi 0, %s73
    %s76 = sphi 0, %s75
    %s90 = sphi 0, %s76
    %s94 = sphi 0, %s94
    %s96 = sphi 0, %s94
    %s97 = sphi 0, %s96
    %s111 = sphi 0, %s97
    %s115 = sphi 0, %s115
    %s117 = sphi 0, %s115
    %s118 = sphi 0, %s117
    %s132 = sphi 0, %s118
    %s136 = sphi 0, %s136
    %s138 = sphi 0, %s136
    %s139 = sphi 0, %s138
    %s153 = sphi 0, %s139
    %s157 = sphi 0, %s157
    %s159 = sphi 0, %s157
    %s160 = sphi 0, %s159
    %s174 = sphi 0, %s160
    %s178 = sphi 0, %s178
    %s180 = sphi 0, %s178
    %s181 = sphi 0, %s180
    %s195 = sphi 0, %s181
    %s199 = sphi 0, %s199
    %s201 = sphi 0, %s199
    %s202 = sphi 0, %s201
    %s216 = sphi 0, %s202
    %s222 = sphi 0, %s224
    %s225 = sphi 0, %s222
    %s226 = sphi 0, %s225
    %s242 = sphi 0, %s226
    %s246 = sphi 0, %s246
    %s248 = sphi 0, %s246
    %s249 = sphi 0, %s248
    %s263 = sphi 0, %s249
    %s267 = sphi 0, %s267
    %s269 = sphi 0, %s267
    %s270 = sphi 0, %s269
    %s284 = sphi 0, %s270
    %s288 = sphi 0, %s288
    %s290 = sphi 0, %s288
    %s291 = sphi 0, %s290
    %s305 = sphi 0, %s291
  $region4: #{res_gcn_forward.1} parent=0 // loop_header_branch
    %21 = sbr.rel (%p19) target = $region8
  $region5: #{res_gcn_forward.1} parent=0 // loop_body
    %s23 = ssub.s32 %s18, 1
    %s24 = ssub.s32 %s18, 2
    %s34 = sadd.s32 1, %s27
    %p35 = scmp.ge.s32.totalorder %s34, 1
    %s36 = scalar_select %p35, 0, %s34
    %s37 = sadd.s32 1, %s26
    %s38 = scalar_select %p35, %s37, %s26
    %p39 = scmp.ge.s32.totalorder %s38, 1
    %s40 = scalar_select %p39, 0, %s38
    %s41 = sadd.s32 1, %s25
    %s42 = scalar_select %p39, %s41, %s25
    %p43 = scmp.ge.s32.totalorder %s42, 2
    %s44 = scalar_select %p43, 0, %s42
    %s45 = ssub.s32 %s26, %s40
    %s46 = ssub.s32 %s27, %s36
    %s47 = sor.u32 %s45, %s46
    %p48 = scmp.eq.s32.totalorder %s47, 0
    %s50 = sadd.s32 %s49, 1
    %s51 = scalar_select %p48, %s49, %s50
    %p54 = pneg %p48
    %p55 = scmp.eq.s32.totalorder %s18, 1
    %p56 = por %p54, %p55
    %p57 = scmp.ne.s32.totalorder %s49, %s52
    %p58 = scmp.eq.s32.totalorder %s18, 0
    %p59 = por %p57, %p58
    %p60 = scmp.ne.s32.totalorder %s49, %s52
    %p61 = scmp.eq.s32.totalorder %s23, 1
    %p62 = por %p60, %p61
    %p63 = scmp.ne.s32.totalorder %s52, %s53
    %p64 = scmp.eq.s32.totalorder %s23, 0
    %p65 = por %p63, %p64
    %p66 = scmp.ne.s32.totalorder %s52, %s53
    %p67 = scmp.eq.s32.totalorder %s24, 1
    %p68 = por %p66, %p67
    %p70 = scmp.ne.s32.totalorder %s53, %s69
    %p71 = scmp.eq.s32.totalorder %s24, 0
    %p72 = por %p70, %p71
    %s74 = sadd.s32 %s73, 1
    %p77 = scmp.eq.s32.totalorder %s18, 1
    %p78 = scmp.ne.s32.totalorder %s73, %s75
    %p79 = scmp.eq.s32.totalorder %s18, 0
    %p80 = por %p78, %p79
    %p81 = scmp.ne.s32.totalorder %s73, %s75
    %p82 = scmp.eq.s32.totalorder %s23, 1
    %p83 = por %p81, %p82
    %p84 = scmp.ne.s32.totalorder %s75, %s76
    %p85 = scmp.eq.s32.totalorder %s23, 0
    %p86 = por %p84, %p85
    %p87 = scmp.ne.s32.totalorder %s75, %s76
    %p88 = scmp.eq.s32.totalorder %s24, 1
    %p89 = por %p87, %p88
    %p91 = scmp.ne.s32.totalorder %s76, %s90
    %p92 = scmp.eq.s32.totalorder %s24, 0
    %p93 = por %p91, %p92
    %s95 = sadd.s32 %s94, 1
    %p98 = scmp.eq.s32.totalorder %s18, 1
    %p99 = scmp.ne.s32.totalorder %s94, %s96
    %p100 = scmp.eq.s32.totalorder %s18, 0
    %p101 = por %p99, %p100
    %p102 = scmp.ne.s32.totalorder %s94, %s96
    %p103 = scmp.eq.s32.totalorder %s23, 1
    %p104 = por %p102, %p103
    %p105 = scmp.ne.s32.totalorder %s96, %s97
    %p106 = scmp.eq.s32.totalorder %s23, 0
    %p107 = por %p105, %p106
    %p108 = scmp.ne.s32.totalorder %s96, %s97
    %p109 = scmp.eq.s32.totalorder %s24, 1
    %p110 = por %p108, %p109
    %p112 = scmp.ne.s32.totalorder %s97, %s111
    %p113 = scmp.eq.s32.totalorder %s24, 0
    %p114 = por %p112, %p113
    %s116 = sadd.s32 %s115, 1
    %p119 = scmp.eq.s32.totalorder %s18, 1
    %p120 = scmp.ne.s32.totalorder %s115, %s117
    %p121 = scmp.eq.s32.totalorder %s18, 0
    %p122 = por %p120, %p121
    %p123 = scmp.ne.s32.totalorder %s115, %s117
    %p124 = scmp.eq.s32.totalorder %s23, 1
    %p125 = por %p123, %p124
    %p126 = scmp.ne.s32.totalorder %s117, %s118
    %p127 = scmp.eq.s32.totalorder %s23, 0
    %p128 = por %p126, %p127
    %p129 = scmp.ne.s32.totalorder %s117, %s118
    %p130 = scmp.eq.s32.totalorder %s24, 1
    %p131 = por %p129, %p130
    %p133 = scmp.ne.s32.totalorder %s118, %s132
    %p134 = scmp.eq.s32.totalorder %s24, 0
    %p135 = por %p133, %p134
    %s137 = sadd.s32 %s136, 1
    %p140 = scmp.eq.s32.totalorder %s18, 1
    %p141 = scmp.ne.s32.totalorder %s136, %s138
    %p142 = scmp.eq.s32.totalorder %s18, 0
    %p143 = por %p141, %p142
    %p144 = scmp.ne.s32.totalorder %s136, %s138
    %p145 = scmp.eq.s32.totalorder %s23, 1
    %p146 = por %p144, %p145
    %p147 = scmp.ne.s32.totalorder %s138, %s139
    %p148 = scmp.eq.s32.totalorder %s23, 0
    %p149 = por %p147, %p148
    %p150 = scmp.ne.s32.totalorder %s138, %s139
    %p151 = scmp.eq.s32.totalorder %s24, 1
    %p152 = por %p150, %p151
    %p154 = scmp.ne.s32.totalorder %s139, %s153
    %p155 = scmp.eq.s32.totalorder %s24, 0
    %p156 = por %p154, %p155
    %s158 = sadd.s32 %s157, 1
    %p161 = scmp.eq.s32.totalorder %s18, 1
    %p162 = scmp.ne.s32.totalorder %s157, %s159
    %p163 = scmp.eq.s32.totalorder %s18, 0
    %p164 = por %p162, %p163
    %p165 = scmp.ne.s32.totalorder %s157, %s159
    %p166 = scmp.eq.s32.totalorder %s23, 1
    %p167 = por %p165, %p166
    %p168 = scmp.ne.s32.totalorder %s159, %s160
    %p169 = scmp.eq.s32.totalorder %s23, 0
    %p170 = por %p168, %p169
    %p171 = scmp.ne.s32.totalorder %s159, %s160
    %p172 = scmp.eq.s32.totalorder %s24, 1
    %p173 = por %p171, %p172
    %p175 = scmp.ne.s32.totalorder %s160, %s174
    %p176 = scmp.eq.s32.totalorder %s24, 0
    %p177 = por %p175, %p176
    %s179 = sadd.s32 %s178, 1
    %p182 = scmp.eq.s32.totalorder %s18, 1
    %p183 = scmp.ne.s32.totalorder %s178, %s180
    %p184 = scmp.eq.s32.totalorder %s18, 0
    %p185 = por %p183, %p184
    %p186 = scmp.ne.s32.totalorder %s178, %s180
    %p187 = scmp.eq.s32.totalorder %s23, 1
    %p188 = por %p186, %p187
    %p189 = scmp.ne.s32.totalorder %s180, %s181
    %p190 = scmp.eq.s32.totalorder %s23, 0
    %p191 = por %p189, %p190
    %p192 = scmp.ne.s32.totalorder %s180, %s181
    %p193 = scmp.eq.s32.totalorder %s24, 1
    %p194 = por %p192, %p193
    %p196 = scmp.ne.s32.totalorder %s181, %s195
    %p197 = scmp.eq.s32.totalorder %s24, 0
    %p198 = por %p196, %p197
    %s200 = sadd.s32 %s199, 1
    %p203 = scmp.eq.s32.totalorder %s18, 1
    %p204 = scmp.ne.s32.totalorder %s199, %s201
    %p205 = scmp.eq.s32.totalorder %s18, 0
    %p206 = por %p204, %p205
    %p207 = scmp.ne.s32.totalorder %s199, %s201
    %p208 = scmp.eq.s32.totalorder %s23, 1
    %p209 = por %p207, %p208
    %p210 = scmp.ne.s32.totalorder %s201, %s202
    %p211 = scmp.eq.s32.totalorder %s23, 0
    %p212 = por %p210, %p211
    %p213 = scmp.ne.s32.totalorder %s201, %s202
    %p214 = scmp.eq.s32.totalorder %s24, 1
    %p215 = por %p213, %p214
    %p217 = scmp.ne.s32.totalorder %s202, %s216
    %p218 = scmp.eq.s32.totalorder %s24, 0
    %p219 = por %p217, %p218
    %s220 = ssub.s32 %s26, %s40
    %p221 = scmp.eq.s32.totalorder %s220, 0
    %s223 = sadd.s32 %s222, 1
    %s224 = scalar_select %p221, %s222, %s223
    %p227 = pneg %p221
    %p228 = scmp.eq.s32.totalorder %s18, 1
    %p229 = por %p227, %p228
    %p230 = scmp.ne.s32.totalorder %s222, %s225
    %p231 = scmp.eq.s32.totalorder %s18, 0
    %p232 = por %p230, %p231
    %p233 = scmp.ne.s32.totalorder %s222, %s225
    %p234 = scmp.eq.s32.totalorder %s23, 1
    %p235 = por %p233, %p234
    %p236 = scmp.ne.s32.totalorder %s225, %s226
    %p237 = scmp.eq.s32.totalorder %s23, 0
    %p238 = por %p236, %p237
    %p239 = scmp.ne.s32.totalorder %s225, %s226
    %p240 = scmp.eq.s32.totalorder %s24, 1
    %p241 = por %p239, %p240
    %p243 = scmp.ne.s32.totalorder %s226, %s242
    %p244 = scmp.eq.s32.totalorder %s24, 0
    %p245 = por %p243, %p244
    %s247 = sadd.s32 %s246, 1
    %p250 = scmp.eq.s32.totalorder %s18, 1
    %p251 = scmp.ne.s32.totalorder %s246, %s248
    %p252 = scmp.eq.s32.totalorder %s18, 0
    %p253 = por %p251, %p252
    %p254 = scmp.ne.s32.totalorder %s246, %s248
    %p255 = scmp.eq.s32.totalorder %s23, 1
    %p256 = por %p254, %p255
    %p257 = scmp.ne.s32.totalorder %s248, %s249
    %p258 = scmp.eq.s32.totalorder %s23, 0
    %p259 = por %p257, %p258
    %p260 = scmp.ne.s32.totalorder %s248, %s249
    %p261 = scmp.eq.s32.totalorder %s24, 1
    %p262 = por %p260, %p261
    %p264 = scmp.ne.s32.totalorder %s249, %s263
    %p265 = scmp.eq.s32.totalorder %s24, 0
    %p266 = por %p264, %p265
    %s268 = sadd.s32 %s267, 1
    %p271 = scmp.eq.s32.totalorder %s18, 1
    %p272 = scmp.ne.s32.totalorder %s267, %s269
    %p273 = scmp.eq.s32.totalorder %s18, 0
    %p274 = por %p272, %p273
    %p275 = scmp.ne.s32.totalorder %s267, %s269
    %p276 = scmp.eq.s32.totalorder %s23, 1
    %p277 = por %p275, %p276
    %p278 = scmp.ne.s32.totalorder %s269, %s270
    %p279 = scmp.eq.s32.totalorder %s23, 0
    %p280 = por %p278, %p279
    %p281 = scmp.ne.s32.totalorder %s269, %s270
    %p282 = scmp.eq.s32.totalorder %s24, 1
    %p283 = por %p281, %p282
    %p285 = scmp.ne.s32.totalorder %s270, %s284
    %p286 = scmp.eq.s32.totalorder %s24, 0
    %p287 = por %p285, %p286
    %s289 = sadd.s32 %s288, 1
    %p292 = scmp.eq.s32.totalorder %s18, 1
    %p293 = scmp.ne.s32.totalorder %s288, %s290
    %p294 = scmp.eq.s32.totalorder %s18, 0
    %p295 = por %p293, %p294
    %p296 = scmp.ne.s32.totalorder %s288, %s290
    %p297 = scmp.eq.s32.totalorder %s23, 1
    %p298 = por %p296, %p297
    %p299 = scmp.ne.s32.totalorder %s290, %s291
    %p300 = scmp.eq.s32.totalorder %s23, 0
    %p301 = por %p299, %p300
    %p302 = scmp.ne.s32.totalorder %s290, %s291
    %p303 = scmp.eq.s32.totalorder %s24, 1
    %p304 = por %p302, %p303
    %p306 = scmp.ne.s32.totalorder %s291, %s305
    %p307 = scmp.eq.s32.totalorder %s24, 0
    %p308 = por %p306, %p307
    %p309 = scmp.le.s32.totalorder 1, %s18
    %p310 = scmp.lt.s32.totalorder %s18, 3
    %p311 = pnand %p309, %p310
    %p312 = pneg %p311
    // Predicated region
    $region9: #{res_gcn_forward.1} parent=5 // pred_check
      _
    $region10: #{res_gcn_forward.1} parent=5 // pred_check_branch
      %314 = sbr.rel (%p311) target = $region12
    $region11: #{res_gcn_forward.1} parent=5 // pred_region
      %s315 = ssub.s32 %s18, 1
      // Predicated region
      $region13: #{res_gcn_forward.1} parent=11 // pred_check
        %p316 = pneg %p65
      $region14: #{res_gcn_forward.1} parent=11 // pred_check_branch
        %318 = sbr.rel (%p316) target = $region16
      $region15: #{res_gcn_forward.1} parent=11 // pred_region
        %s319 = smul.u32 16, %s29
        %p320 = scmp.lt.s32.totalorder %s319, 15
        %s321 = scalar_select %p320, %s319, 15
        %p322 = scmp.lt.s32.totalorder %s30, 0
        %s323 = scalar_select %p322, %s30, 0
        %s324 = sadd.s32 %s323, %s321
        %s325 = smul.addr %s324, 4
        %s326 = scalar_lea.vmem %s0, %s325
        %s327 = smul.u32 16, %s29
      $region16: #{res_gcn_forward.1} parent=11 // pred_fallthru
        _
      // Predicated region
      $region17: #{res_gcn_forward.1} parent=11 // pred_check
        %p328 = pneg %p86
      $region18: #{res_gcn_forward.1} parent=11 // pred_check_branch
        %330 = sbr.rel (%p328) target = $region20
      $region19: #{res_gcn_forward.1} parent=11 // pred_region
        _
      $region20: #{res_gcn_forward.1} parent=11 // pred_fallthru
        _
      // Predicated region
      $region21: #{res_gcn_forward.1} parent=11 // pred_check
        %p331 = pneg %p107
      $region22: #{res_gcn_forward.1} parent=11 // pred_check_branch
        %333 = sbr.rel (%p331) target = $region24
      $region23: #{res_gcn_forward.1} parent=11 // pred_region
        _
      $region24: #{res_gcn_forward.1} parent=11 // pred_fallthru
        _
      // Predicated region
      $region25: #{res_gcn_forward.1} parent=11 // pred_check
        %p334 = pneg %p128
      $region26: #{res_gcn_forward.1} parent=11 // pred_check_branch
        %336 = sbr.rel (%p334) target = $region28
      $region27: #{res_gcn_forward.1} parent=11 // pred_region
        _
      $region28: #{res_gcn_forward.1} parent=11 // pred_fallthru
        _
      // Predicated region
      $region29: #{res_gcn_forward.1} parent=11 // pred_check
        %p337 = pneg %p149
      $region30: #{res_gcn_forward.1} parent=11 // pred_check_branch
        %339 = sbr.rel (%p337) target = $region32
      $region31: #{res_gcn_forward.1} parent=11 // pred_region
        _
      $region32: #{res_gcn_forward.1} parent=11 // pred_fallthru
        _
      // Predicated region
      $region33: #{res_gcn_forward.1} parent=11 // pred_check
        %p340 = pneg %p170
      $region34: #{res_gcn_forward.1} parent=11 // pred_check_branch
        %342 = sbr.rel (%p340) target = $region36
      $region35: #{res_gcn_forward.1} parent=11 // pred_region
        _
      $region36: #{res_gcn_forward.1} parent=11 // pred_fallthru
        _
      // Predicated region
      $region37: #{res_gcn_forward.1} parent=11 // pred_check
        %p343 = pneg %p191
      $region38: #{res_gcn_forward.1} parent=11 // pred_check_branch
        %345 = sbr.rel (%p343) target = $region40
      $region39: #{res_gcn_forward.1} parent=11 // pred_region
        _
      $region40: #{res_gcn_forward.1} parent=11 // pred_fallthru
        _
      // Predicated region
      $region41: #{res_gcn_forward.1} parent=11 // pred_check
        %p346 = pneg %p212
      $region42: #{res_gcn_forward.1} parent=11 // pred_check_branch
        %348 = sbr.rel (%p346) target = $region44
      $region43: #{res_gcn_forward.1} parent=11 // pred_region
        _
      $region44: #{res_gcn_forward.1} parent=11 // pred_fallthru
        _
      // Predicated region
      $region45: #{res_gcn_forward.1} parent=11 // pred_check
        %p349 = pneg %p238
      $region46: #{res_gcn_forward.1} parent=11 // pred_check_branch
        %351 = sbr.rel (%p349) target = $region48
      $region47: #{res_gcn_forward.1} parent=11 // pred_region
        %p352 = scmp.lt.s32.totalorder %s29, 0
        %s353 = scalar_select %p352, %s29, 0
        %s354 = scalar_lea.vmem %s8, %s353
      $region48: #{res_gcn_forward.1} parent=11 // pred_fallthru
        _
    $region12: #{res_gcn_forward.1} parent=5 // pred_fallthru
      _
    %p355 = scmp.lt.s32.totalorder %s18, 2
    // Predicated region
    $region49: #{res_gcn_forward.1} parent=5 // pred_check
      %p356 = pneg %p355
    $region50: #{res_gcn_forward.1} parent=5 // pred_check_branch
      %358 = sbr.rel (%p356) target = $region52
    $region51: #{res_gcn_forward.1} parent=5 // pred_region
      _
    $region52: #{res_gcn_forward.1} parent=5 // pred_fallthru
      _
    %p359 = scmp.le.s32.totalorder 1, %s18
    %p360 = scmp.lt.s32.totalorder %s18, 3
    %p361 = pnand %p359, %p360
    %p362 = pneg %p361
    // Predicated region
    $region53: #{res_gcn_forward.1} parent=5 // pred_check
      _
    $region54: #{res_gcn_forward.1} parent=5 // pred_check_branch
      %364 = sbr.rel (%p361) target = $region56
    $region55: #{res_gcn_forward.1} parent=5 // pred_region
      %s365 = ssub.s32 %s18, 1
      %s366 = smul.u32 16, %s29
      %p367 = scmp.lt.s32.totalorder %s366, 15
      %s368 = scalar_select %p367, %s366, 15
      %p369 = scmp.lt.s32.totalorder %s30, 0
      %s370 = scalar_select %p369, %s30, 0
      %s371 = sadd.s32 %s370, %s368
      %s372 = smul.addr %s371, 4
      %s373 = scalar_lea.vmem %s0, %s372
      %p374 = pneg %p65
      %p375 = pneg %p62
      %p376 = pneg %p86
      %p377 = pneg %p83
      %p378 = pneg %p107
      %p379 = pneg %p104
      %p380 = pneg %p128
      %p381 = pneg %p125
      %p382 = pneg %p149
      %p383 = pneg %p146
      %p384 = pneg %p170
      %p385 = pneg %p167
      %p386 = pneg %p191
      %p387 = pneg %p188
      %p388 = pneg %p212
      %p389 = pneg %p209
      %p390 = scmp.lt.s32.totalorder %s29, 0
      %s391 = scalar_select %p390, %s29, 0
      %s392 = scalar_lea.vmem %s8, %s391
      %p393 = pneg %p238
      %p394 = pneg %p235
      %p395 = pneg %p259
      %p396 = pneg %p256
      %p397 = pneg %p280
      %p398 = pneg %p277
      %p399 = pneg %p301
      %p400 = pneg %p298
      %s401 = smul.u32 16, %s29
      %p402 = scmp.lt.s32.totalorder %s401, 15
      %s403 = scalar_select %p402, %s401, 15
      %p404 = scmp.lt.s32.totalorder %s30, 0
      %s405 = scalar_select %p404, %s30, 0
      %s406 = sadd.s32 %s405, %s403
      %s407 = smul.addr %s406, 4
      %s408 = scalar_lea.vmem %s0, %s407
      %s409 = smul.u32 16, %s29
      %p410 = scmp.lt.s32.totalorder %s29, 0
      %s411 = scalar_select %p410, %s29, 0
      %s412 = scalar_lea.vmem %s8, %s411
      %p413 = scmp.eq.s32.totalorder %s29, 0
      %p414 = scmp.eq.s32.totalorder %s30, 0
      %p415 = pnand %p413, %p414
      %p416 = pneg %p415
      %p417 = scmp.eq.s32.totalorder %s28, 0
      %p418 = pnand %p416, %p417
      %p419 = pneg %p418
      // Predicated region
      $region57: #{res_gcn_forward.1} parent=55 // pred_check
        _
      $region58: #{res_gcn_forward.1} parent=55 // pred_check_branch
        %421 = sbr.rel (%p418) target = $region60
      $region59: #{res_gcn_forward.1} parent=55 // pred_region
        %v422 = vld [vmem:[%s1] sm:$0xff]
        %v423 = vld [vmem:[%s1 + $0x8] sm:$0xff]
        %v424 = vld [vmem:[%s1 + $0x10] sm:$0xff]
        %v425 = vld [vmem:[%s1 + $0x18] sm:$0xff]
        %v426 = vld [vmem:[%s1 + $0x20] sm:$0xff]
        %v427 = vld [vmem:[%s1 + $0x28] sm:$0xff]
        %v428 = vld [vmem:[%s1 + $0x30] sm:$0xff]
        %v429 = vld [vmem:[%s1 + $0x38] sm:$0xff]
        %v430 = vld [vmem:[%s1 + $0x40] sm:$0xff]
        %v431 = vld [vmem:[%s1 + $0x48] sm:$0xff]
        %v432 = vld [vmem:[%s1 + $0x50] sm:$0xff]
        %v433 = vld [vmem:[%s1 + $0x58] sm:$0xff]
        %v434 = vld [vmem:[%s1 + $0x60] sm:$0xff]
        %v435 = vld [vmem:[%s1 + $0x68] sm:$0xff]
        %v436 = vld [vmem:[%s1 + $0x70] sm:$0xff]
        %v437 = vld [vmem:[%s1 + $0x78] sm:$0xff]
        %v438 = vld [vmem:[%s1 + $0x80] sm:$0xff]
        %v439 = vld [vmem:[%s1 + $0x88] sm:$0xff]
        %v440 = vld [vmem:[%s1 + $0x90] sm:$0xff]
        %v441 = vld [vmem:[%s1 + $0x98] sm:$0xff]
        %v442 = vld [vmem:[%s1 + $0xa0] sm:$0xff]
        %v443 = vld [vmem:[%s1 + $0xa8] sm:$0xff]
        %v444 = vld [vmem:[%s1 + $0xb0] sm:$0xff]
        %v445 = vld [vmem:[%s1 + $0xb8] sm:$0xff]
        %v446 = vld [vmem:[%s1 + $0xc0] sm:$0xff]
        %v447 = vld [vmem:[%s1 + $0xc8] sm:$0xff]
        %v448 = vld [vmem:[%s1 + $0xd0] sm:$0xff]
        %v449 = vld [vmem:[%s1 + $0xd8] sm:$0xff]
        %v450 = vld [vmem:[%s1 + $0xe0] sm:$0xff]
        %v451 = vld [vmem:[%s1 + $0xe8] sm:$0xff]
        %v452 = vld [vmem:[%s1 + $0xf0] sm:$0xff]
        %v453 = vld [vmem:[%s1 + $0xf8] sm:$0xff]
        %v454 = vld [vmem:[%s1 + $0x100] sm:$0xff]
        %v455 = vld [vmem:[%s1 + $0x108] sm:$0xff]
        %v456 = vld [vmem:[%s1 + $0x110] sm:$0xff]
        %v457 = vld [vmem:[%s1 + $0x118] sm:$0xff]
        %v458 = vld [vmem:[%s1 + $0x120] sm:$0xff]
        %v459 = vld [vmem:[%s1 + $0x128] sm:$0xff]
        %v460 = vld [vmem:[%s1 + $0x130] sm:$0xff]
        %v461 = vld [vmem:[%s1 + $0x138] sm:$0xff]
        %v462 = vld [vmem:[%s1 + $0x140] sm:$0xff]
        %v463 = vld [vmem:[%s1 + $0x148] sm:$0xff]
        %v464 = vld [vmem:[%s1 + $0x150] sm:$0xff]
        %v465 = vld [vmem:[%s1 + $0x158] sm:$0xff]
        %v466 = vld [vmem:[%s1 + $0x160] sm:$0xff]
        %v467 = vld [vmem:[%s1 + $0x168] sm:$0xff]
        %v468 = vld [vmem:[%s1 + $0x170] sm:$0xff]
        %v469 = vld [vmem:[%s1 + $0x178] sm:$0xff]
        %v470 = vld [vmem:[%s2] sm:$0xf]
        %v471 = vld [vmem:[%s2 + $0x4] sm:$0xf]
        %v472 = vld [vmem:[%s2 + $0x8] sm:$0xf]
        %v473 = vld [vmem:[%s2 + $0xc] sm:$0xf]
        %v474 = vld [vmem:[%s2 + $0x10] sm:$0xf]
        %v475 = vld [vmem:[%s2 + $0x14] sm:$0xf]
        %v476 = vld [vmem:[%s2 + $0x18] sm:$0xf]
        %v477 = vld [vmem:[%s2 + $0x1c] sm:$0xf]
        %v478 = vld [vmem:[%s2 + $0x20] sm:$0xf]
        %v479 = vld [vmem:[%s2 + $0x24] sm:$0xf]
        %v480 = vld [vmem:[%s2 + $0x28] sm:$0xf]
        %v481 = vld [vmem:[%s2 + $0x2c] sm:$0xf]
        %v482 = vld [vmem:[%s2 + $0x30] sm:$0xf]
        %v483 = vld [vmem:[%s2 + $0x34] sm:$0xf]
        %v484 = vld [vmem:[%s2 + $0x38] sm:$0xf]
        %v485 = vld [vmem:[%s2 + $0x3c] sm:$0xf]
        %v486 = vld [vmem:[%s2 + $0x40] sm:$0xf]
        %v487 = vld [vmem:[%s2 + $0x44] sm:$0xf]
        %v488 = vld [vmem:[%s2 + $0x48] sm:$0xf]
        %v489 = vld [vmem:[%s2 + $0x4c] sm:$0xf]
        %v490 = vld [vmem:[%s2 + $0x50] sm:$0xf]
        %v491 = vld [vmem:[%s2 + $0x54] sm:$0xf]
        %v492 = vld [vmem:[%s2 + $0x58] sm:$0xf]
        %v493 = vld [vmem:[%s2 + $0x5c] sm:$0xf]
        %v494 = vld [vmem:[%s2 + $0x60] sm:$0xf]
        %v495 = vld [vmem:[%s2 + $0x64] sm:$0xf]
        %v496 = vld [vmem:[%s2 + $0x68] sm:$0xf]
        %v497 = vld [vmem:[%s2 + $0x6c] sm:$0xf]
        %v498 = vld [vmem:[%s2 + $0x70] sm:$0xf]
        %v499 = vld [vmem:[%s2 + $0x74] sm:$0xf]
        %v500 = vld [vmem:[%s2 + $0x78] sm:$0xf]
        %v501 = vld [vmem:[%s2 + $0x7c] sm:$0xf]
        %v502 = vld [vmem:[%s2 + $0x80] sm:$0xf]
        %v503 = vld [vmem:[%s2 + $0x84] sm:$0xf]
        %v504 = vld [vmem:[%s2 + $0x88] sm:$0xf]
        %v505 = vld [vmem:[%s2 + $0x8c] sm:$0xf]
        %v506 = vld [vmem:[%s2 + $0x90] sm:$0xf]
        %v507 = vld [vmem:[%s2 + $0x94] sm:$0xf]
        %v508 = vld [vmem:[%s2 + $0x98] sm:$0xf]
        %v509 = vld [vmem:[%s2 + $0x9c] sm:$0xf]
        %v510 = vld [vmem:[%s2 + $0xa0] sm:$0xf]
        %v511 = vld [vmem:[%s2 + $0xa4] sm:$0xf]
        %v512 = vld [vmem:[%s2 + $0xa8] sm:$0xf]
        %v513 = vld [vmem:[%s2 + $0xac] sm:$0xf]
        %v514 = vld [vmem:[%s2 + $0xb0] sm:$0xf]
        %v515 = vld [vmem:[%s2 + $0xb4] sm:$0xf]
        %v516 = vld [vmem:[%s2 + $0xb8] sm:$0xf]
        %v517 = vld [vmem:[%s2 + $0xbc] sm:$0xf]
        %v518 = vld [vmem:[%s2 + $0xc0] sm:$0xf]
        %v519 = vld [vmem:[%s2 + $0xc4] sm:$0xf]
        %v520 = vld [vmem:[%s2 + $0xc8] sm:$0xf]
        %v521 = vld [vmem:[%s2 + $0xcc] sm:$0xf]
        %v522 = vld [vmem:[%s2 + $0xd0] sm:$0xf]
        %v523 = vld [vmem:[%s2 + $0xd4] sm:$0xf]
        %v524 = vld [vmem:[%s2 + $0xd8] sm:$0xf]
        %v525 = vld [vmem:[%s2 + $0xdc] sm:$0xf]
        %v526 = vld [vmem:[%s2 + $0xe0] sm:$0xf]
        %v527 = vld [vmem:[%s2 + $0xe4] sm:$0xf]
        %v528 = vld [vmem:[%s2 + $0xe8] sm:$0xf]
        %v529 = vld [vmem:[%s2 + $0xec] sm:$0xf]
        %v530 = vld [vmem:[%s2 + $0xf0] sm:$0xf]
        %v531 = vld [vmem:[%s2 + $0xf4] sm:$0xf]
        %v532 = vld [vmem:[%s2 + $0xf8] sm:$0xf]
        %v533 = vld [vmem:[%s2 + $0xfc] sm:$0xf]
        %v534 = vld [vmem:[%s2 + $0x100] sm:$0xf]
        %v535 = vld [vmem:[%s2 + $0x104] sm:$0xf]
        %v536 = vld [vmem:[%s2 + $0x108] sm:$0xf]
        %v537 = vld [vmem:[%s2 + $0x10c] sm:$0xf]
        %v538 = vld [vmem:[%s2 + $0x110] sm:$0xf]
        %v539 = vld [vmem:[%s2 + $0x114] sm:$0xf]
        %v540 = vld [vmem:[%s2 + $0x118] sm:$0xf]
        %v541 = vld [vmem:[%s2 + $0x11c] sm:$0xf]
        %v542 = vld [vmem:[%s2 + $0x120] sm:$0xf]
        %v543 = vld [vmem:[%s2 + $0x124] sm:$0xf]
        %v544 = vld [vmem:[%s2 + $0x128] sm:$0xf]
        %v545 = vld [vmem:[%s2 + $0x12c] sm:$0xf]
        %v546 = vld [vmem:[%s2 + $0x130] sm:$0xf]
        %v547 = vld [vmem:[%s2 + $0x134] sm:$0xf]
        %v548 = vld [vmem:[%s2 + $0x138] sm:$0xf]
        %v549 = vld [vmem:[%s2 + $0x13c] sm:$0xf]
        %v550 = vld [vmem:[%s2 + $0x140] sm:$0xf]
        %v551 = vld [vmem:[%s2 + $0x144] sm:$0xf]
        %v552 = vld [vmem:[%s2 + $0x148] sm:$0xf]
        %v553 = vld [vmem:[%s2 + $0x14c] sm:$0xf]
        %v554 = vld [vmem:[%s2 + $0x150] sm:$0xf]
        %v555 = vld [vmem:[%s2 + $0x154] sm:$0xf]
        %v556 = vld [vmem:[%s2 + $0x158] sm:$0xf]
        %v557 = vld [vmem:[%s2 + $0x15c] sm:$0xf]
        %v558 = vld [vmem:[%s2 + $0x160] sm:$0xf]
        %v559 = vld [vmem:[%s2 + $0x164] sm:$0xf]
        %v560 = vld [vmem:[%s2 + $0x168] sm:$0xf]
        %v561 = vld [vmem:[%s2 + $0x16c] sm:$0xf]
        %v562 = vld [vmem:[%s2 + $0x170] sm:$0xf]
        %v563 = vld [vmem:[%s2 + $0x174] sm:$0xf]
        %v564 = vld [vmem:[%s2 + $0x178] sm:$0xf]
        %v565 = vld [vmem:[%s2 + $0x17c] sm:$0xf]
        %v614 = vunpack.c.l.b16 %v422
        %v615 = vunpack.c.h.b16 %v422
        %v616 = vunpack.c.l.b16 %v423
        %v617 = vunpack.c.h.b16 %v423
        %v618 = vunpack.c.l.b16 %v424
        %v619 = vunpack.c.h.b16 %v424
        %v620 = vunpack.c.l.b16 %v425
        %v621 = vunpack.c.h.b16 %v425
        %v622 = vunpack.c.l.b16 %v426
        %v623 = vunpack.c.h.b16 %v426
        %v624 = vunpack.c.l.b16 %v427
        %v625 = vunpack.c.h.b16 %v427
        %v626 = vunpack.c.l.b16 %v428
        %v627 = vunpack.c.h.b16 %v428
        %v628 = vunpack.c.l.b16 %v429
        %v629 = vunpack.c.h.b16 %v429
        %v630 = vunpack.c.l.b16 %v430
        %v631 = vunpack.c.h.b16 %v430
        %v632 = vunpack.c.l.b16 %v431
        %v633 = vunpack.c.h.b16 %v431
        %v634 = vunpack.c.l.b16 %v432
        %v635 = vunpack.c.h.b16 %v432
        %v636 = vunpack.c.l.b16 %v433
        %v637 = vunpack.c.h.b16 %v433
        %v638 = vunpack.c.l.b16 %v434
        %v639 = vunpack.c.h.b16 %v434
        %v640 = vunpack.c.l.b16 %v435
        %v641 = vunpack.c.h.b16 %v435
        %v642 = vunpack.c.l.b16 %v436
        %v643 = vunpack.c.h.b16 %v436
        %v644 = vunpack.c.l.b16 %v437
        %v645 = vunpack.c.h.b16 %v437
        %v646 = vunpack.c.l.b16 %v438
        %v647 = vunpack.c.h.b16 %v438
        %v648 = vunpack.c.l.b16 %v439
        %v649 = vunpack.c.h.b16 %v439
        %v650 = vunpack.c.l.b16 %v440
        %v651 = vunpack.c.h.b16 %v440
        %v652 = vunpack.c.l.b16 %v441
        %v653 = vunpack.c.h.b16 %v441
        %v654 = vunpack.c.l.b16 %v442
        %v655 = vunpack.c.h.b16 %v442
        %v656 = vunpack.c.l.b16 %v443
        %v657 = vunpack.c.h.b16 %v443
        %v658 = vunpack.c.l.b16 %v444
        %v659 = vunpack.c.h.b16 %v444
        %v660 = vunpack.c.l.b16 %v445
        %v661 = vunpack.c.h.b16 %v445
        %v662 = vunpack.c.l.b16 %v446
        %v663 = vunpack.c.h.b16 %v446
        %v664 = vunpack.c.l.b16 %v447
        %v665 = vunpack.c.h.b16 %v447
        %v666 = vunpack.c.l.b16 %v448
        %v667 = vunpack.c.h.b16 %v448
        %v668 = vunpack.c.l.b16 %v449
        %v669 = vunpack.c.h.b16 %v449
        %v670 = vunpack.c.l.b16 %v450
        %v671 = vunpack.c.h.b16 %v450
        %v672 = vunpack.c.l.b16 %v451
        %v673 = vunpack.c.h.b16 %v451
        %v674 = vunpack.c.l.b16 %v452
        %v675 = vunpack.c.h.b16 %v452
        %v676 = vunpack.c.l.b16 %v453
        %v677 = vunpack.c.h.b16 %v453
        %v678 = vunpack.c.l.b16 %v454
        %v679 = vunpack.c.h.b16 %v454
        %v680 = vunpack.c.l.b16 %v455
        %v681 = vunpack.c.h.b16 %v455
        %v682 = vunpack.c.l.b16 %v456
        %v683 = vunpack.c.h.b16 %v456
        %v684 = vunpack.c.l.b16 %v457
        %v685 = vunpack.c.h.b16 %v457
        %v686 = vunpack.c.l.b16 %v458
        %v687 = vunpack.c.h.b16 %v458
        %v688 = vunpack.c.l.b16 %v459
        %v689 = vunpack.c.h.b16 %v459
        %v690 = vunpack.c.l.b16 %v460
        %v691 = vunpack.c.h.b16 %v460
        %v692 = vunpack.c.l.b16 %v461
        %v693 = vunpack.c.h.b16 %v461
        %v694 = vunpack.c.l.b16 %v462
        %v695 = vunpack.c.h.b16 %v462
        %v696 = vunpack.c.l.b16 %v463
        %v697 = vunpack.c.h.b16 %v463
        %v698 = vunpack.c.l.b16 %v464
        %v699 = vunpack.c.h.b16 %v464
        %v700 = vunpack.c.l.b16 %v465
        %v701 = vunpack.c.h.b16 %v465
        %v702 = vunpack.c.l.b16 %v466
        %v703 = vunpack.c.h.b16 %v466
        %v704 = vunpack.c.l.b16 %v467
        %v705 = vunpack.c.h.b16 %v467
        %v706 = vunpack.c.l.b16 %v468
        %v707 = vunpack.c.h.b16 %v468
        %v708 = vunpack.c.l.b16 %v469
        %v709 = vunpack.c.h.b16 %v469
        %v710 = vpack.c.b16 %v620, %v614
        %v711 = vpack.c.b16 %v621, %v615
        %v712 = vpack.c.b16 %v622, %v616
        %v713 = vpack.c.b16 %v623, %v617
        %v714 = vpack.c.b16 %v624, %v618
        %v715 = vpack.c.b16 %v625, %v619
        %v716 = vpack.c.b16 %v632, %v626
        %v717 = vpack.c.b16 %v633, %v627
        %v718 = vpack.c.b16 %v634, %v628
        %v719 = vpack.c.b16 %v635, %v629
        %v720 = vpack.c.b16 %v636, %v630
        %v721 = vpack.c.b16 %v637, %v631
        %v722 = vpack.c.b16 %v644, %v638
        %v723 = vpack.c.b16 %v645, %v639
        %v724 = vpack.c.b16 %v646, %v640
        %v725 = vpack.c.b16 %v647, %v641
        %v726 = vpack.c.b16 %v648, %v642
        %v727 = vpack.c.b16 %v649, %v643
        %v728 = vpack.c.b16 %v656, %v650
        %v729 = vpack.c.b16 %v657, %v651
        %v730 = vpack.c.b16 %v658, %v652
        %v731 = vpack.c.b16 %v659, %v653
        %v732 = vpack.c.b16 %v660, %v654
        %v733 = vpack.c.b16 %v661, %v655
        %v734 = vpack.c.b16 %v668, %v662
        %v735 = vpack.c.b16 %v669, %v663
        %v736 = vpack.c.b16 %v670, %v664
        %v737 = vpack.c.b16 %v671, %v665
        %v738 = vpack.c.b16 %v672, %v666
        %v739 = vpack.c.b16 %v673, %v667
        %v740 = vpack.c.b16 %v680, %v674
        %v741 = vpack.c.b16 %v681, %v675
        %v742 = vpack.c.b16 %v682, %v676
        %v743 = vpack.c.b16 %v683, %v677
        %v744 = vpack.c.b16 %v684, %v678
        %v745 = vpack.c.b16 %v685, %v679
        %v746 = vpack.c.b16 %v692, %v686
        %v747 = vpack.c.b16 %v693, %v687
        %v748 = vpack.c.b16 %v694, %v688
        %v749 = vpack.c.b16 %v695, %v689
        %v750 = vpack.c.b16 %v696, %v690
        %v751 = vpack.c.b16 %v697, %v691
        %v752 = vpack.c.b16 %v704, %v698
        %v753 = vpack.c.b16 %v705, %v699
        %v754 = vpack.c.b16 %v706, %v700
        %v755 = vpack.c.b16 %v707, %v701
        %v756 = vpack.c.b16 %v708, %v702
        %v757 = vpack.c.b16 %v709, %v703
        %v902 = vunpack.c.l.b16 %v470
        %v903 = vunpack.c.l.b16 %v471
        %v904 = vunpack.c.l.b16 %v472
        %v905 = vunpack.c.l.b16 %v473
        %v906 = vunpack.c.l.b16 %v474
        %v907 = vunpack.c.l.b16 %v475
        %v908 = vunpack.c.l.b16 %v476
        %v909 = vunpack.c.l.b16 %v477
        %v910 = vunpack.c.l.b16 %v478
        %v911 = vunpack.c.l.b16 %v479
        %v912 = vunpack.c.l.b16 %v480
        %v913 = vunpack.c.l.b16 %v481
        %v914 = vunpack.c.l.b16 %v482
        %v915 = vunpack.c.l.b16 %v483
        %v916 = vunpack.c.l.b16 %v484
        %v917 = vunpack.c.l.b16 %v485
        %v918 = vunpack.c.l.b16 %v486
        %v919 = vunpack.c.l.b16 %v487
        %v920 = vunpack.c.l.b16 %v488
        %v921 = vunpack.c.l.b16 %v489
        %v922 = vunpack.c.l.b16 %v490
        %v923 = vunpack.c.l.b16 %v491
        %v924 = vunpack.c.l.b16 %v492
        %v925 = vunpack.c.l.b16 %v493
        %v926 = vunpack.c.l.b16 %v494
        %v927 = vunpack.c.l.b16 %v495
        %v928 = vunpack.c.l.b16 %v496
        %v929 = vunpack.c.l.b16 %v497
        %v930 = vunpack.c.l.b16 %v498
        %v931 = vunpack.c.l.b16 %v499
        %v932 = vunpack.c.l.b16 %v500
        %v933 = vunpack.c.l.b16 %v501
        %v934 = vunpack.c.l.b16 %v502
        %v935 = vunpack.c.l.b16 %v503
        %v936 = vunpack.c.l.b16 %v504
        %v937 = vunpack.c.l.b16 %v505
        %v938 = vunpack.c.l.b16 %v506
        %v939 = vunpack.c.l.b16 %v507
        %v940 = vunpack.c.l.b16 %v508
        %v941 = vunpack.c.l.b16 %v509
        %v942 = vunpack.c.l.b16 %v510
        %v943 = vunpack.c.l.b16 %v511
        %v944 = vunpack.c.l.b16 %v512
        %v945 = vunpack.c.l.b16 %v513
        %v946 = vunpack.c.l.b16 %v514
        %v947 = vunpack.c.l.b16 %v515
        %v948 = vunpack.c.l.b16 %v516
        %v949 = vunpack.c.l.b16 %v517
        %v950 = vunpack.c.l.b16 %v518
        %v951 = vunpack.c.l.b16 %v519
        %v952 = vunpack.c.l.b16 %v520
        %v953 = vunpack.c.l.b16 %v521
        %v954 = vunpack.c.l.b16 %v522
        %v955 = vunpack.c.l.b16 %v523
        %v956 = vunpack.c.l.b16 %v524
        %v957 = vunpack.c.l.b16 %v525
        %v958 = vunpack.c.l.b16 %v526
        %v959 = vunpack.c.l.b16 %v527
        %v960 = vunpack.c.l.b16 %v528
        %v961 = vunpack.c.l.b16 %v529
        %v962 = vunpack.c.l.b16 %v530
        %v963 = vunpack.c.l.b16 %v531
        %v964 = vunpack.c.l.b16 %v532
        %v965 = vunpack.c.l.b16 %v533
        %v966 = vunpack.c.l.b16 %v534
        %v967 = vunpack.c.l.b16 %v535
        %v968 = vunpack.c.l.b16 %v536
        %v969 = vunpack.c.l.b16 %v537
        %v970 = vunpack.c.l.b16 %v538
        %v971 = vunpack.c.l.b16 %v539
        %v972 = vunpack.c.l.b16 %v540
        %v973 = vunpack.c.l.b16 %v541
        %v974 = vunpack.c.l.b16 %v542
        %v975 = vunpack.c.l.b16 %v543
        %v976 = vunpack.c.l.b16 %v544
        %v977 = vunpack.c.l.b16 %v545
        %v978 = vunpack.c.l.b16 %v546
        %v979 = vunpack.c.l.b16 %v547
        %v980 = vunpack.c.l.b16 %v548
        %v981 = vunpack.c.l.b16 %v549
        %v982 = vunpack.c.l.b16 %v550
        %v983 = vunpack.c.l.b16 %v551
        %v984 = vunpack.c.l.b16 %v552
        %v985 = vunpack.c.l.b16 %v553
        %v986 = vunpack.c.l.b16 %v554
        %v987 = vunpack.c.l.b16 %v555
        %v988 = vunpack.c.l.b16 %v556
        %v989 = vunpack.c.l.b16 %v557
        %v990 = vunpack.c.l.b16 %v558
        %v991 = vunpack.c.l.b16 %v559
        %v992 = vunpack.c.l.b16 %v560
        %v993 = vunpack.c.l.b16 %v561
        %v994 = vunpack.c.l.b16 %v562
        %v995 = vunpack.c.l.b16 %v563
        %v996 = vunpack.c.l.b16 %v564
        %v997 = vunpack.c.l.b16 %v565
        %v998 = vpack.c.b16 %v903, %v902
        %v999 = vpack.c.b16 %v905, %v904
        %v1000 = vpack.c.b16 %v907, %v906
        %v1001 = vpack.c.b16 %v909, %v908
        %v1002 = vpack.c.b16 %v911, %v910
        %v1003 = vpack.c.b16 %v913, %v912
        %v1004 = vpack.c.b16 %v915, %v914
        %v1005 = vpack.c.b16 %v917, %v916
        %v1006 = vpack.c.b16 %v919, %v918
        %v1007 = vpack.c.b16 %v921, %v920
        %v1008 = vpack.c.b16 %v923, %v922
        %v1009 = vpack.c.b16 %v925, %v924
        %v1010 = vpack.c.b16 %v927, %v926
        %v1011 = vpack.c.b16 %v929, %v928
        %v1012 = vpack.c.b16 %v931, %v930
        %v1013 = vpack.c.b16 %v933, %v932
        %v1014 = vpack.c.b16 %v935, %v934
        %v1015 = vpack.c.b16 %v937, %v936
        %v1016 = vpack.c.b16 %v939, %v938
        %v1017 = vpack.c.b16 %v941, %v940
        %v1018 = vpack.c.b16 %v943, %v942
        %v1019 = vpack.c.b16 %v945, %v944
        %v1020 = vpack.c.b16 %v947, %v946
        %v1021 = vpack.c.b16 %v949, %v948
        %v1022 = vpack.c.b16 %v951, %v950
        %v1023 = vpack.c.b16 %v953, %v952
        %v1024 = vpack.c.b16 %v955, %v954
        %v1025 = vpack.c.b16 %v957, %v956
        %v1026 = vpack.c.b16 %v959, %v958
        %v1027 = vpack.c.b16 %v961, %v960
        %v1028 = vpack.c.b16 %v963, %v962
        %v1029 = vpack.c.b16 %v965, %v964
        %v1030 = vpack.c.b16 %v967, %v966
        %v1031 = vpack.c.b16 %v969, %v968
        %v1032 = vpack.c.b16 %v971, %v970
        %v1033 = vpack.c.b16 %v973, %v972
        %v1034 = vpack.c.b16 %v975, %v974
        %v1035 = vpack.c.b16 %v977, %v976
        %v1036 = vpack.c.b16 %v979, %v978
        %v1037 = vpack.c.b16 %v981, %v980
        %v1038 = vpack.c.b16 %v983, %v982
        %v1039 = vpack.c.b16 %v985, %v984
        %v1040 = vpack.c.b16 %v987, %v986
        %v1041 = vpack.c.b16 %v989, %v988
        %v1042 = vpack.c.b16 %v991, %v990
        %v1043 = vpack.c.b16 %v993, %v992
        %v1044 = vpack.c.b16 %v995, %v994
        %v1045 = vpack.c.b16 %v997, %v996
        %1094 = vmatpush.bf16.msra.mxu0 %v1005
        %1095 = vmatpush.bf16.msra.mxu0 %v1004
        %1096 = vmatpush.bf16.msra.mxu0 %v1003
        %1097 = vmatpush.bf16.msra.mxu0 %v1002
        %1098 = vmatpush.bf16.msra.mxu0 %v1001
        %1099 = vmatpush.bf16.msra.mxu0 %v1000
        %1100 = vmatpush.bf16.msra.mxu0 %v999
        %1101 = vmatpush.bf16.msra.mxu0 %v998
        %1102 = vmatmul.bf16.gmra.mxu0 %v710
        %v1103 = vpop.f32.mrf.mxu0
        %v1104 = vadd.f32 0.0, %v1103
        %v1105 = vpop.f32.mrf.mxu0
        %v1106 = vadd.f32 0.0, %v1105
        %1107 = vmatmul.bf16.gmra.mxu0 %v716
        %v1108 = vpop.f32.mrf.mxu0
        %v1109 = vadd.f32 0.0, %v1108
        %v1110 = vpop.f32.mrf.mxu0
        %v1111 = vadd.f32 0.0, %v1110
        %1112 = vmatmul.bf16.gmra.mxu0 %v722
        %v1113 = vpop.f32.mrf.mxu0
        %v1114 = vadd.f32 0.0, %v1113
        %v1115 = vpop.f32.mrf.mxu0
        %v1116 = vadd.f32 0.0, %v1115
        %1117 = vmatmul.bf16.gmra.mxu0 %v728
        %v1118 = vpop.f32.mrf.mxu0
        %v1119 = vadd.f32 0.0, %v1118
        %v1120 = vpop.f32.mrf.mxu0
        %v1121 = vadd.f32 0.0, %v1120
        %1122 = vmatmul.bf16.gmra.mxu0 %v734
        %v1123 = vpop.f32.mrf.mxu0
        %v1124 = vadd.f32 0.0, %v1123
        %v1125 = vpop.f32.mrf.mxu0
        %v1126 = vadd.f32 0.0, %v1125
        %1127 = vmatmul.bf16.gmra.mxu0 %v740
        %v1128 = vpop.f32.mrf.mxu0
        %v1129 = vadd.f32 0.0, %v1128
        %v1130 = vpop.f32.mrf.mxu0
        %v1131 = vadd.f32 0.0, %v1130
        %1132 = vmatmul.bf16.gmra.mxu0 %v746
        %v1133 = vpop.f32.mrf.mxu0
        %v1134 = vadd.f32 0.0, %v1133
        %v1135 = vpop.f32.mrf.mxu0
        %v1136 = vadd.f32 0.0, %v1135
        %1137 = vmatmul.bf16.gmra.mxu0 %v752
        %v1138 = vpop.f32.mrf.mxu0
        %v1139 = vadd.f32 0.0, %v1138
        %v1140 = vpop.f32.mrf.mxu0
        %v1141 = vadd.f32 0.0, %v1140
        %1142 = vdwg.mxu0
        %1143 = vmatpush.bf16.msra.mxu0 %v1013
        %1144 = vmatpush.bf16.msra.mxu0 %v1012
        %1145 = vmatpush.bf16.msra.mxu0 %v1011
        %1146 = vmatpush.bf16.msra.mxu0 %v1010
        %1147 = vmatpush.bf16.msra.mxu0 %v1009
        %1148 = vmatpush.bf16.msra.mxu0 %v1008
        %1149 = vmatpush.bf16.msra.mxu0 %v1007
        %1150 = vmatpush.bf16.msra.mxu0 %v1006
        %1151 = vmatmul.bf16.gmra.mxu0 %v711
        %v1152 = vpop.f32.mrf.mxu0
        %v1153 = vadd.f32 %v1104, %v1152
        %v1154 = vpop.f32.mrf.mxu0
        %v1155 = vadd.f32 %v1106, %v1154
        %1156 = vmatmul.bf16.gmra.mxu0 %v717
        %v1157 = vpop.f32.mrf.mxu0
        %v1158 = vadd.f32 %v1109, %v1157
        %v1159 = vpop.f32.mrf.mxu0
        %v1160 = vadd.f32 %v1111, %v1159
        %1161 = vmatmul.bf16.gmra.mxu0 %v723
        %v1162 = vpop.f32.mrf.mxu0
        %v1163 = vadd.f32 %v1114, %v1162
        %v1164 = vpop.f32.mrf.mxu0
        %v1165 = vadd.f32 %v1116, %v1164
        %1166 = vmatmul.bf16.gmra.mxu0 %v729
        %v1167 = vpop.f32.mrf.mxu0
        %v1168 = vadd.f32 %v1119, %v1167
        %v1169 = vpop.f32.mrf.mxu0
        %v1170 = vadd.f32 %v1121, %v1169
        %1171 = vmatmul.bf16.gmra.mxu0 %v735
        %v1172 = vpop.f32.mrf.mxu0
        %v1173 = vadd.f32 %v1124, %v1172
        %v1174 = vpop.f32.mrf.mxu0
        %v1175 = vadd.f32 %v1126, %v1174
        %1176 = vmatmul.bf16.gmra.mxu0 %v741
        %v1177 = vpop.f32.mrf.mxu0
        %v1178 = vadd.f32 %v1129, %v1177
        %v1179 = vpop.f32.mrf.mxu0
        %v1180 = vadd.f32 %v1131, %v1179
        %1181 = vmatmul.bf16.gmra.mxu0 %v747
        %v1182 = vpop.f32.mrf.mxu0
        %v1183 = vadd.f32 %v1134, %v1182
        %v1184 = vpop.f32.mrf.mxu0
        %v1185 = vadd.f32 %v1136, %v1184
        %1186 = vmatmul.bf16.gmra.mxu0 %v753
        %v1187 = vpop.f32.mrf.mxu0
        %v1188 = vadd.f32 %v1139, %v1187
        %v1189 = vpop.f32.mrf.mxu0
        %v1190 = vadd.f32 %v1141, %v1189
        %1191 = vdwg.mxu0
        %1192 = vmatpush.bf16.msra.mxu0 %v1021
        %1193 = vmatpush.bf16.msra.mxu0 %v1020
        %1194 = vmatpush.bf16.msra.mxu0 %v1019
        %1195 = vmatpush.bf16.msra.mxu0 %v1018
        %1196 = vmatpush.bf16.msra.mxu0 %v1017
        %1197 = vmatpush.bf16.msra.mxu0 %v1016
        %1198 = vmatpush.bf16.msra.mxu0 %v1015
        %1199 = vmatpush.bf16.msra.mxu0 %v1014
        %1200 = vmatmul.bf16.gmra.mxu0 %v712
        %v1201 = vpop.f32.mrf.mxu0
        %v1202 = vadd.f32 %v1153, %v1201
        %v1203 = vpop.f32.mrf.mxu0
        %v1204 = vadd.f32 %v1155, %v1203
        %1205 = vmatmul.bf16.gmra.mxu0 %v718
        %v1206 = vpop.f32.mrf.mxu0
        %v1207 = vadd.f32 %v1158, %v1206
        %v1208 = vpop.f32.mrf.mxu0
        %v1209 = vadd.f32 %v1160, %v1208
        %1210 = vmatmul.bf16.gmra.mxu0 %v724
        %v1211 = vpop.f32.mrf.mxu0
        %v1212 = vadd.f32 %v1163, %v1211
        %v1213 = vpop.f32.mrf.mxu0
        %v1214 = vadd.f32 %v1165, %v1213
        %1215 = vmatmul.bf16.gmra.mxu0 %v730
        %v1216 = vpop.f32.mrf.mxu0
        %v1217 = vadd.f32 %v1168, %v1216
        %v1218 = vpop.f32.mrf.mxu0
        %v1219 = vadd.f32 %v1170, %v1218
        %1220 = vmatmul.bf16.gmra.mxu0 %v736
        %v1221 = vpop.f32.mrf.mxu0
        %v1222 = vadd.f32 %v1173, %v1221
        %v1223 = vpop.f32.mrf.mxu0
        %v1224 = vadd.f32 %v1175, %v1223
        %1225 = vmatmul.bf16.gmra.mxu0 %v742
        %v1226 = vpop.f32.mrf.mxu0
        %v1227 = vadd.f32 %v1178, %v1226
        %v1228 = vpop.f32.mrf.mxu0
        %v1229 = vadd.f32 %v1180, %v1228
        %1230 = vmatmul.bf16.gmra.mxu0 %v748
        %v1231 = vpop.f32.mrf.mxu0
        %v1232 = vadd.f32 %v1183, %v1231
        %v1233 = vpop.f32.mrf.mxu0
        %v1234 = vadd.f32 %v1185, %v1233
        %1235 = vmatmul.bf16.gmra.mxu0 %v754
        %v1236 = vpop.f32.mrf.mxu0
        %v1237 = vadd.f32 %v1188, %v1236
        %v1238 = vpop.f32.mrf.mxu0
        %v1239 = vadd.f32 %v1190, %v1238
        %1240 = vdwg.mxu0
        %1241 = vmatpush.bf16.msra.mxu0 %v1029
        %1242 = vmatpush.bf16.msra.mxu0 %v1028
        %1243 = vmatpush.bf16.msra.mxu0 %v1027
        %1244 = vmatpush.bf16.msra.mxu0 %v1026
        %1245 = vmatpush.bf16.msra.mxu0 %v1025
        %1246 = vmatpush.bf16.msra.mxu0 %v1024
        %1247 = vmatpush.bf16.msra.mxu0 %v1023
        %1248 = vmatpush.bf16.msra.mxu0 %v1022
        %1249 = vmatmul.bf16.gmra.mxu0 %v713
        %v1250 = vpop.f32.mrf.mxu0
        %v1251 = vadd.f32 %v1202, %v1250
        %v1252 = vpop.f32.mrf.mxu0
        %v1253 = vadd.f32 %v1204, %v1252
        %1254 = vmatmul.bf16.gmra.mxu0 %v719
        %v1255 = vpop.f32.mrf.mxu0
        %v1256 = vadd.f32 %v1207, %v1255
        %v1257 = vpop.f32.mrf.mxu0
        %v1258 = vadd.f32 %v1209, %v1257
        %1259 = vmatmul.bf16.gmra.mxu0 %v725
        %v1260 = vpop.f32.mrf.mxu0
        %v1261 = vadd.f32 %v1212, %v1260
        %v1262 = vpop.f32.mrf.mxu0
        %v1263 = vadd.f32 %v1214, %v1262
        %1264 = vmatmul.bf16.gmra.mxu0 %v731
        %v1265 = vpop.f32.mrf.mxu0
        %v1266 = vadd.f32 %v1217, %v1265
        %v1267 = vpop.f32.mrf.mxu0
        %v1268 = vadd.f32 %v1219, %v1267
        %1269 = vmatmul.bf16.gmra.mxu0 %v737
        %v1270 = vpop.f32.mrf.mxu0
        %v1271 = vadd.f32 %v1222, %v1270
        %v1272 = vpop.f32.mrf.mxu0
        %v1273 = vadd.f32 %v1224, %v1272
        %1274 = vmatmul.bf16.gmra.mxu0 %v743
        %v1275 = vpop.f32.mrf.mxu0
        %v1276 = vadd.f32 %v1227, %v1275
        %v1277 = vpop.f32.mrf.mxu0
        %v1278 = vadd.f32 %v1229, %v1277
        %1279 = vmatmul.bf16.gmra.mxu0 %v749
        %v1280 = vpop.f32.mrf.mxu0
        %v1281 = vadd.f32 %v1232, %v1280
        %v1282 = vpop.f32.mrf.mxu0
        %v1283 = vadd.f32 %v1234, %v1282
        %1284 = vmatmul.bf16.gmra.mxu0 %v755
        %v1285 = vpop.f32.mrf.mxu0
        %v1286 = vadd.f32 %v1237, %v1285
        %v1287 = vpop.f32.mrf.mxu0
        %v1288 = vadd.f32 %v1239, %v1287
        %1289 = vdwg.mxu0
        %1290 = vmatpush.bf16.msra.mxu0 %v1037
        %1291 = vmatpush.bf16.msra.mxu0 %v1036
        %1292 = vmatpush.bf16.msra.mxu0 %v1035
        %1293 = vmatpush.bf16.msra.mxu0 %v1034
        %1294 = vmatpush.bf16.msra.mxu0 %v1033
        %1295 = vmatpush.bf16.msra.mxu0 %v1032
        %1296 = vmatpush.bf16.msra.mxu0 %v1031
        %1297 = vmatpush.bf16.msra.mxu0 %v1030
        %1298 = vmatmul.bf16.gmra.mxu0 %v714
        %v1299 = vpop.f32.mrf.mxu0
        %v1300 = vadd.f32 %v1251, %v1299
        %v1301 = vpop.f32.mrf.mxu0
        %v1302 = vadd.f32 %v1253, %v1301
        %1303 = vmatmul.bf16.gmra.mxu0 %v720
        %v1304 = vpop.f32.mrf.mxu0
        %v1305 = vadd.f32 %v1256, %v1304
        %v1306 = vpop.f32.mrf.mxu0
        %v1307 = vadd.f32 %v1258, %v1306
        %1308 = vmatmul.bf16.gmra.mxu0 %v726
        %v1309 = vpop.f32.mrf.mxu0
        %v1310 = vadd.f32 %v1261, %v1309
        %v1311 = vpop.f32.mrf.mxu0
        %v1312 = vadd.f32 %v1263, %v1311
        %1313 = vmatmul.bf16.gmra.mxu0 %v732
        %v1314 = vpop.f32.mrf.mxu0
        %v1315 = vadd.f32 %v1266, %v1314
        %v1316 = vpop.f32.mrf.mxu0
        %v1317 = vadd.f32 %v1268, %v1316
        %1318 = vmatmul.bf16.gmra.mxu0 %v738
        %v1319 = vpop.f32.mrf.mxu0
        %v1320 = vadd.f32 %v1271, %v1319
        %v1321 = vpop.f32.mrf.mxu0
        %v1322 = vadd.f32 %v1273, %v1321
        %1323 = vmatmul.bf16.gmra.mxu0 %v744
        %v1324 = vpop.f32.mrf.mxu0
        %v1325 = vadd.f32 %v1276, %v1324
        %v1326 = vpop.f32.mrf.mxu0
        %v1327 = vadd.f32 %v1278, %v1326
        %1328 = vmatmul.bf16.gmra.mxu0 %v750
        %v1329 = vpop.f32.mrf.mxu0
        %v1330 = vadd.f32 %v1281, %v1329
        %v1331 = vpop.f32.mrf.mxu0
        %v1332 = vadd.f32 %v1283, %v1331
        %1333 = vmatmul.bf16.gmra.mxu0 %v756
        %v1334 = vpop.f32.mrf.mxu0
        %v1335 = vadd.f32 %v1286, %v1334
        %v1336 = vpop.f32.mrf.mxu0
        %v1337 = vadd.f32 %v1288, %v1336
        %1338 = vdwg.mxu0
        %1339 = vmatpush.bf16.msra.mxu0 %v1045
        %1340 = vmatpush.bf16.msra.mxu0 %v1044
        %1341 = vmatpush.bf16.msra.mxu0 %v1043
        %1342 = vmatpush.bf16.msra.mxu0 %v1042
        %1343 = vmatpush.bf16.msra.mxu0 %v1041
        %1344 = vmatpush.bf16.msra.mxu0 %v1040
        %1345 = vmatpush.bf16.msra.mxu0 %v1039
        %1346 = vmatpush.bf16.msra.mxu0 %v1038
        %1347 = vmatmul.bf16.gmra.mxu0 %v715
        %v1348 = vpop.f32.mrf.mxu0
        %v1349 = vadd.f32 %v1300, %v1348
        %v1350 = vpop.f32.mrf.mxu0
        %v1351 = vadd.f32 %v1302, %v1350
        %1352 = vmatmul.bf16.gmra.mxu0 %v721
        %v1353 = vpop.f32.mrf.mxu0
        %v1354 = vadd.f32 %v1305, %v1353
        %v1355 = vpop.f32.mrf.mxu0
        %v1356 = vadd.f32 %v1307, %v1355
        %1357 = vmatmul.bf16.gmra.mxu0 %v727
        %v1358 = vpop.f32.mrf.mxu0
        %v1359 = vadd.f32 %v1310, %v1358
        %v1360 = vpop.f32.mrf.mxu0
        %v1361 = vadd.f32 %v1312, %v1360
        %1362 = vmatmul.bf16.gmra.mxu0 %v733
        %v1363 = vpop.f32.mrf.mxu0
        %v1364 = vadd.f32 %v1315, %v1363
        %v1365 = vpop.f32.mrf.mxu0
        %v1366 = vadd.f32 %v1317, %v1365
        %1367 = vmatmul.bf16.gmra.mxu0 %v739
        %v1368 = vpop.f32.mrf.mxu0
        %v1369 = vadd.f32 %v1320, %v1368
        %v1370 = vpop.f32.mrf.mxu0
        %v1371 = vadd.f32 %v1322, %v1370
        %1372 = vmatmul.bf16.gmra.mxu0 %v745
        %v1373 = vpop.f32.mrf.mxu0
        %v1374 = vadd.f32 %v1325, %v1373
        %v1375 = vpop.f32.mrf.mxu0
        %v1376 = vadd.f32 %v1327, %v1375
        %1377 = vmatmul.bf16.gmra.mxu0 %v751
        %v1378 = vpop.f32.mrf.mxu0
        %v1379 = vadd.f32 %v1330, %v1378
        %v1380 = vpop.f32.mrf.mxu0
        %v1381 = vadd.f32 %v1332, %v1380
        %1382 = vmatmul.bf16.gmra.mxu0 %v757
        %v1383 = vpop.f32.mrf.mxu0
        %v1384 = vadd.f32 %v1335, %v1383
        %v1385 = vpop.f32.mrf.mxu0
        %v1386 = vadd.f32 %v1337, %v1385
        %1387 = vdwg.mxu0
        %v1388 = vpack.c.bf16 %v1349, %v1349
        %v1389 = vpack.c.bf16 %v1351, %v1351
        %v1390 = vpack.c.bf16 %v1354, %v1354
        %v1391 = vpack.c.bf16 %v1356, %v1356
        %v1392 = vpack.c.bf16 %v1359, %v1359
        %v1393 = vpack.c.bf16 %v1361, %v1361
        %v1394 = vpack.c.bf16 %v1364, %v1364
        %v1395 = vpack.c.bf16 %v1366, %v1366
        %v1396 = vpack.c.bf16 %v1369, %v1369
        %v1397 = vpack.c.bf16 %v1371, %v1371
        %v1398 = vpack.c.bf16 %v1374, %v1374
        %v1399 = vpack.c.bf16 %v1376, %v1376
        %v1400 = vpack.c.bf16 %v1379, %v1379
        %v1401 = vpack.c.bf16 %v1381, %v1381
        %v1402 = vpack.c.bf16 %v1384, %v1384
        %v1403 = vpack.c.bf16 %v1386, %v1386
        %1404 = vst [vmem:[#allocation2] sm:$0xf] %v1388
        %1405 = vst [vmem:[#allocation2 + $0x4] sm:$0xf] %v1389
        %1406 = vst [vmem:[#allocation2 + $0x8] sm:$0xf] %v1390
        %1407 = vst [vmem:[#allocation2 + $0xc] sm:$0xf] %v1391
        %1408 = vst [vmem:[#allocation2 + $0x10] sm:$0xf] %v1392
        %1409 = vst [vmem:[#allocation2 + $0x14] sm:$0xf] %v1393
        %1410 = vst [vmem:[#allocation2 + $0x18] sm:$0xf] %v1394
        %1411 = vst [vmem:[#allocation2 + $0x1c] sm:$0xf] %v1395
        %1412 = vst [vmem:[#allocation2 + $0x20] sm:$0xf] %v1396
        %1413 = vst [vmem:[#allocation2 + $0x24] sm:$0xf] %v1397
        %1414 = vst [vmem:[#allocation2 + $0x28] sm:$0xf] %v1398
        %1415 = vst [vmem:[#allocation2 + $0x2c] sm:$0xf] %v1399
        %1416 = vst [vmem:[#allocation2 + $0x30] sm:$0xf] %v1400
        %1417 = vst [vmem:[#allocation2 + $0x34] sm:$0xf] %v1401
        %1418 = vst [vmem:[#allocation2 + $0x38] sm:$0xf] %v1402
        %1419 = vst [vmem:[#allocation2 + $0x3c] sm:$0xf] %v1403
      $region60: #{res_gcn_forward.1} parent=55 // pred_fallthru
        _
      %p1420 = scmp.eq.s32.totalorder %s28, 1
      %p1421 = pnand %p416, %p1420
      %p1422 = pneg %p1421
      // Predicated region
      $region61: #{res_gcn_forward.1} parent=55 // pred_check
        _
      $region62: #{res_gcn_forward.1} parent=55 // pred_check_branch
        %1424 = sbr.rel (%p1421) target = $region64
      $region63: #{res_gcn_forward.1} parent=55 // pred_region
        %v1425 = vld [vmem:[#allocation3] sm:$0xf]
        %v1426 = vld [vmem:[#allocation3 + $0x4] sm:$0xf]
        %v1427 = vld [vmem:[#allocation3 + $0x8] sm:$0xf]
        %v1428 = vld [vmem:[#allocation3 + $0xc] sm:$0xf]
        %v1429 = vld [vmem:[#allocation3 + $0x10] sm:$0xf]
        %v1430 = vld [vmem:[#allocation3 + $0x14] sm:$0xf]
        %v1431 = vld [vmem:[#allocation3 + $0x18] sm:$0xf]
        %v1432 = vld [vmem:[#allocation3 + $0x1c] sm:$0xf]
        %v1433 = vld [vmem:[#allocation3 + $0x20] sm:$0xf]
        %v1434 = vld [vmem:[#allocation3 + $0x24] sm:$0xf]
        %v1435 = vld [vmem:[#allocation3 + $0x28] sm:$0xf]
        %v1436 = vld [vmem:[#allocation3 + $0x2c] sm:$0xf]
        %v1437 = vld [vmem:[#allocation3 + $0x30] sm:$0xf]
        %v1438 = vld [vmem:[#allocation3 + $0x34] sm:$0xf]
        %v1439 = vld [vmem:[#allocation3 + $0x38] sm:$0xf]
        %v1440 = vld [vmem:[#allocation3 + $0x3c] sm:$0xf]
        %v1441 = vld [vmem:[%s4] sm:$0xf]
        %v1442 = vld [vmem:[%s4 + $0x4] sm:$0xf]
        %v1443 = vld [vmem:[%s4 + $0x8] sm:$0xf]
        %v1444 = vld [vmem:[%s4 + $0xc] sm:$0xf]
        %v1445 = vld [vmem:[%s4 + $0x10] sm:$0xf]
        %v1446 = vld [vmem:[%s4 + $0x14] sm:$0xf]
        %v1447 = vld [vmem:[%s4 + $0x18] sm:$0xf]
        %v1448 = vld [vmem:[%s4 + $0x1c] sm:$0xf]
        %v1449 = vld [vmem:[%s4 + $0x20] sm:$0xf]
        %v1450 = vld [vmem:[%s4 + $0x24] sm:$0xf]
        %v1451 = vld [vmem:[%s4 + $0x28] sm:$0xf]
        %v1452 = vld [vmem:[%s4 + $0x2c] sm:$0xf]
        %v1453 = vld [vmem:[%s4 + $0x30] sm:$0xf]
        %v1454 = vld [vmem:[%s4 + $0x34] sm:$0xf]
        %v1455 = vld [vmem:[%s4 + $0x38] sm:$0xf]
        %v1456 = vld [vmem:[%s4 + $0x3c] sm:$0xf]
        %v1473 = vunpack.c.l.b16 %v1425
        %v1474 = vunpack.c.l.b16 %v1426
        %v1475 = vunpack.c.l.b16 %v1427
        %v1476 = vunpack.c.l.b16 %v1428
        %v1477 = vunpack.c.l.b16 %v1429
        %v1478 = vunpack.c.l.b16 %v1430
        %v1479 = vunpack.c.l.b16 %v1431
        %v1480 = vunpack.c.l.b16 %v1432
        %v1481 = vunpack.c.l.b16 %v1433
        %v1482 = vunpack.c.l.b16 %v1434
        %v1483 = vunpack.c.l.b16 %v1435
        %v1484 = vunpack.c.l.b16 %v1436
        %v1485 = vunpack.c.l.b16 %v1437
        %v1486 = vunpack.c.l.b16 %v1438
        %v1487 = vunpack.c.l.b16 %v1439
        %v1488 = vunpack.c.l.b16 %v1440
        %v1489 = vpack.c.b16 %v1474, %v1473
        %v1490 = vpack.c.b16 %v1476, %v1475
        %v1491 = vpack.c.b16 %v1478, %v1477
        %v1492 = vpack.c.b16 %v1480, %v1479
        %v1493 = vpack.c.b16 %v1482, %v1481
        %v1494 = vpack.c.b16 %v1484, %v1483
        %v1495 = vpack.c.b16 %v1486, %v1485
        %v1496 = vpack.c.b16 %v1488, %v1487
        %v1521 = vunpack.c.l.b16 %v1441
        %v1522 = vunpack.c.l.b16 %v1442
        %v1523 = vunpack.c.l.b16 %v1443
        %v1524 = vunpack.c.l.b16 %v1444
        %v1525 = vunpack.c.l.b16 %v1445
        %v1526 = vunpack.c.l.b16 %v1446
        %v1527 = vunpack.c.l.b16 %v1447
        %v1528 = vunpack.c.l.b16 %v1448
        %v1529 = vunpack.c.l.b16 %v1449
        %v1530 = vunpack.c.l.b16 %v1450
        %v1531 = vunpack.c.l.b16 %v1451
        %v1532 = vunpack.c.l.b16 %v1452
        %v1533 = vunpack.c.l.b16 %v1453
        %v1534 = vunpack.c.l.b16 %v1454
        %v1535 = vunpack.c.l.b16 %v1455
        %v1536 = vunpack.c.l.b16 %v1456
        %v1537 = vpack.c.b16 %v1522, %v1521
        %v1538 = vpack.c.b16 %v1524, %v1523
        %v1539 = vpack.c.b16 %v1526, %v1525
        %v1540 = vpack.c.b16 %v1528, %v1527
        %v1541 = vpack.c.b16 %v1530, %v1529
        %v1542 = vpack.c.b16 %v1532, %v1531
        %v1543 = vpack.c.b16 %v1534, %v1533
        %v1544 = vpack.c.b16 %v1536, %v1535
        %1553 = vmatpush.bf16.msra.mxu0 %v1544
        %1554 = vmatpush.bf16.msra.mxu0 %v1543
        %1555 = vmatpush.bf16.msra.mxu0 %v1542
        %1556 = vmatpush.bf16.msra.mxu0 %v1541
        %1557 = vmatpush.bf16.msra.mxu0 %v1540
        %1558 = vmatpush.bf16.msra.mxu0 %v1539
        %1559 = vmatpush.bf16.msra.mxu0 %v1538
        %1560 = vmatpush.bf16.msra.mxu0 %v1537
        %1561 = vmatmul.bf16.gmra.mxu0 %v1489
        %v1562 = vpop.f32.mrf.mxu0
        %v1563 = vadd.f32 0.0, %v1562
        %v1564 = vpop.f32.mrf.mxu0
        %v1565 = vadd.f32 0.0, %v1564
        %1566 = vmatmul.bf16.gmra.mxu0 %v1490
        %v1567 = vpop.f32.mrf.mxu0
        %v1568 = vadd.f32 0.0, %v1567
        %v1569 = vpop.f32.mrf.mxu0
        %v1570 = vadd.f32 0.0, %v1569
        %1571 = vmatmul.bf16.gmra.mxu0 %v1491
        %v1572 = vpop.f32.mrf.mxu0
        %v1573 = vadd.f32 0.0, %v1572
        %v1574 = vpop.f32.mrf.mxu0
        %v1575 = vadd.f32 0.0, %v1574
        %1576 = vmatmul.bf16.gmra.mxu0 %v1492
        %v1577 = vpop.f32.mrf.mxu0
        %v1578 = vadd.f32 0.0, %v1577
        %v1579 = vpop.f32.mrf.mxu0
        %v1580 = vadd.f32 0.0, %v1579
        %1581 = vmatmul.bf16.gmra.mxu0 %v1493
        %v1582 = vpop.f32.mrf.mxu0
        %v1583 = vadd.f32 0.0, %v1582
        %v1584 = vpop.f32.mrf.mxu0
        %v1585 = vadd.f32 0.0, %v1584
        %1586 = vmatmul.bf16.gmra.mxu0 %v1494
        %v1587 = vpop.f32.mrf.mxu0
        %v1588 = vadd.f32 0.0, %v1587
        %v1589 = vpop.f32.mrf.mxu0
        %v1590 = vadd.f32 0.0, %v1589
        %1591 = vmatmul.bf16.gmra.mxu0 %v1495
        %v1592 = vpop.f32.mrf.mxu0
        %v1593 = vadd.f32 0.0, %v1592
        %v1594 = vpop.f32.mrf.mxu0
        %v1595 = vadd.f32 0.0, %v1594
        %1596 = vmatmul.bf16.gmra.mxu0 %v1496
        %v1597 = vpop.f32.mrf.mxu0
        %v1598 = vadd.f32 0.0, %v1597
        %v1599 = vpop.f32.mrf.mxu0
        %v1600 = vadd.f32 0.0, %v1599
        %1601 = vdwg.mxu0
        %v1602 = vpack.c.bf16 %v1563, %v1563
        %v1603 = vpack.c.bf16 %v1565, %v1565
        %v1604 = vpack.c.bf16 %v1568, %v1568
        %v1605 = vpack.c.bf16 %v1570, %v1570
        %v1606 = vpack.c.bf16 %v1573, %v1573
        %v1607 = vpack.c.bf16 %v1575, %v1575
        %v1608 = vpack.c.bf16 %v1578, %v1578
        %v1609 = vpack.c.bf16 %v1580, %v1580
        %v1610 = vpack.c.bf16 %v1583, %v1583
        %v1611 = vpack.c.bf16 %v1585, %v1585
        %v1612 = vpack.c.bf16 %v1588, %v1588
        %v1613 = vpack.c.bf16 %v1590, %v1590
        %v1614 = vpack.c.bf16 %v1593, %v1593
        %v1615 = vpack.c.bf16 %v1595, %v1595
        %v1616 = vpack.c.bf16 %v1598, %v1598
        %v1617 = vpack.c.bf16 %v1600, %v1600
        %1618 = vst [vmem:[#allocation2] sm:$0xf] %v1602
        %1619 = vst [vmem:[#allocation2 + $0x4] sm:$0xf] %v1603
        %1620 = vst [vmem:[#allocation2 + $0x8] sm:$0xf] %v1604
        %1621 = vst [vmem:[#allocation2 + $0xc] sm:$0xf] %v1605
        %1622 = vst [vmem:[#allocation2 + $0x10] sm:$0xf] %v1606
        %1623 = vst [vmem:[#allocation2 + $0x14] sm:$0xf] %v1607
        %1624 = vst [vmem:[#allocation2 + $0x18] sm:$0xf] %v1608
        %1625 = vst [vmem:[#allocation2 + $0x1c] sm:$0xf] %v1609
        %1626 = vst [vmem:[#allocation2 + $0x20] sm:$0xf] %v1610
        %1627 = vst [vmem:[#allocation2 + $0x24] sm:$0xf] %v1611
        %1628 = vst [vmem:[#allocation2 + $0x28] sm:$0xf] %v1612
        %1629 = vst [vmem:[#allocation2 + $0x2c] sm:$0xf] %v1613
        %1630 = vst [vmem:[#allocation2 + $0x30] sm:$0xf] %v1614
        %1631 = vst [vmem:[#allocation2 + $0x34] sm:$0xf] %v1615
        %1632 = vst [vmem:[#allocation2 + $0x38] sm:$0xf] %v1616
        %1633 = vst [vmem:[#allocation2 + $0x3c] sm:$0xf] %v1617
        %1634 = vst [vmem:[#allocation5] sm:$0xff] 0.0
      $region64: #{res_gcn_forward.1} parent=55 // pred_fallthru
        _
      // Predicated region
      $region65: #{res_gcn_forward.1} parent=55 // pred_check
        %p1635 = pneg %p414
      $region66: #{res_gcn_forward.1} parent=55 // pred_check_branch
        %1637 = sbr.rel (%p1635) target = $region68
      $region67: #{res_gcn_forward.1} parent=55 // pred_region
        %1638 = vst [vmem:[#allocation4] sm:$0xff] 0.0
        %1639 = vst [vmem:[#allocation4 + $0x8] sm:$0xff] 0.0
        %1640 = vst [vmem:[#allocation4 + $0x10] sm:$0xff] 0.0
        %1641 = vst [vmem:[#allocation4 + $0x18] sm:$0xff] 0.0
        %1642 = vst [vmem:[#allocation4 + $0x20] sm:$0xff] 0.0
        %1643 = vst [vmem:[#allocation4 + $0x28] sm:$0xff] 0.0
        %1644 = vst [vmem:[#allocation4 + $0x30] sm:$0xff] 0.0
        %1645 = vst [vmem:[#allocation4 + $0x38] sm:$0xff] 0.0
        %1646 = vst [vmem:[#allocation4 + $0x40] sm:$0xff] 0.0
        %1647 = vst [vmem:[#allocation4 + $0x48] sm:$0xff] 0.0
        %1648 = vst [vmem:[#allocation4 + $0x50] sm:$0xff] 0.0
        %1649 = vst [vmem:[#allocation4 + $0x58] sm:$0xff] 0.0
        %1650 = vst [vmem:[#allocation4 + $0x60] sm:$0xff] 0.0
        %1651 = vst [vmem:[#allocation4 + $0x68] sm:$0xff] 0.0
        %1652 = vst [vmem:[#allocation4 + $0x70] sm:$0xff] 0.0
        %1653 = vst [vmem:[#allocation4 + $0x78] sm:$0xff] 0.0
      $region68: #{res_gcn_forward.1} parent=55 // pred_fallthru
        _
      %s1654 = smul.u32 %s30, 128
      %v1655 = vld [vmem:[#allocation4] sm:$0xff]
      %v1656 = vld [vmem:[#allocation4 + $0x8] sm:$0xff]
      %v1657 = vld [vmem:[#allocation4 + $0x10] sm:$0xff]
      %v1658 = vld [vmem:[#allocation4 + $0x18] sm:$0xff]
      %v1659 = vld [vmem:[#allocation4 + $0x20] sm:$0xff]
      %v1660 = vld [vmem:[#allocation4 + $0x28] sm:$0xff]
      %v1661 = vld [vmem:[#allocation4 + $0x30] sm:$0xff]
      %v1662 = vld [vmem:[#allocation4 + $0x38] sm:$0xff]
      %v1663 = vld [vmem:[#allocation4 + $0x40] sm:$0xff]
      %v1664 = vld [vmem:[#allocation4 + $0x48] sm:$0xff]
      %v1665 = vld [vmem:[#allocation4 + $0x50] sm:$0xff]
      %v1666 = vld [vmem:[#allocation4 + $0x58] sm:$0xff]
      %v1667 = vld [vmem:[#allocation4 + $0x60] sm:$0xff]
      %v1668 = vld [vmem:[#allocation4 + $0x68] sm:$0xff]
      %v1669 = vld [vmem:[#allocation4 + $0x70] sm:$0xff]
      %v1670 = vld [vmem:[#allocation4 + $0x78] sm:$0xff]
      %v1671 = vld [vmem:[%s408] sm:$0xf]
      %v1672 = vld [vmem:[%s408 + $0x4] sm:$0xf]
      %v1673 = vld [vmem:[%s408 + $0x8] sm:$0xf]
      %v1674 = vld [vmem:[%s408 + $0xc] sm:$0xf]
      %v1675 = vld [vmem:[%s408 + $0x10] sm:$0xf]
      %v1676 = vld [vmem:[%s408 + $0x14] sm:$0xf]
      %v1677 = vld [vmem:[%s408 + $0x18] sm:$0xf]
      %v1678 = vld [vmem:[%s408 + $0x1c] sm:$0xf]
      %v1679 = vld [vmem:[%s408 + $0x20] sm:$0xf]
      %v1680 = vld [vmem:[%s408 + $0x24] sm:$0xf]
      %v1681 = vld [vmem:[%s408 + $0x28] sm:$0xf]
      %v1682 = vld [vmem:[%s408 + $0x2c] sm:$0xf]
      %v1683 = vld [vmem:[%s408 + $0x30] sm:$0xf]
      %v1684 = vld [vmem:[%s408 + $0x34] sm:$0xf]
      %v1685 = vld [vmem:[%s408 + $0x38] sm:$0xf]
      %v1686 = vld [vmem:[%s408 + $0x3c] sm:$0xf]
      %s1687 = sshra.s32 %s1654, 3
      %s1688 = sand.u32 %s1654, 7
      %s1689 = smul.addr %s1687, 4
      %s1690 = scalar_lea.vmem [#allocation2], %s1689
      %v1691 = vld [vmem:[%s1690] sm:$0xf]
      %v1692 = vld [vmem:[%s1690 + $0x4] sm:$0xf]
      %v1693 = vld [vmem:[%s1690 + $0x8] sm:$0xf]
      %v1694 = vld [vmem:[%s1690 + $0xc] sm:$0xf]
      %v1695 = vld [vmem:[%s1690 + $0x10] sm:$0xf]
      %v1696 = vld [vmem:[%s1690 + $0x14] sm:$0xf]
      %v1697 = vld [vmem:[%s1690 + $0x18] sm:$0xf]
      %v1698 = vld [vmem:[%s1690 + $0x1c] sm:$0xf]
      %v1699 = vld [vmem:[%s1690 + $0x20] sm:$0xf]
      %v1700 = vld [vmem:[%s1690 + $0x24] sm:$0xf]
      %v1701 = vld [vmem:[%s1690 + $0x28] sm:$0xf]
      %v1702 = vld [vmem:[%s1690 + $0x2c] sm:$0xf]
      %v1703 = vld [vmem:[%s1690 + $0x30] sm:$0xf]
      %v1704 = vld [vmem:[%s1690 + $0x34] sm:$0xf]
      %v1705 = vld [vmem:[%s1690 + $0x38] sm:$0xf]
      %v1706 = vld [vmem:[%s1690 + $0x3c] sm:$0xf]
      %v1723 = vunpack.c.l.b16 %v1671
      %v1724 = vunpack.c.l.b16 %v1672
      %v1725 = vunpack.c.l.b16 %v1673
      %v1726 = vunpack.c.l.b16 %v1674
      %v1727 = vunpack.c.l.b16 %v1675
      %v1728 = vunpack.c.l.b16 %v1676
      %v1729 = vunpack.c.l.b16 %v1677
      %v1730 = vunpack.c.l.b16 %v1678
      %v1731 = vunpack.c.l.b16 %v1679
      %v1732 = vunpack.c.l.b16 %v1680
      %v1733 = vunpack.c.l.b16 %v1681
      %v1734 = vunpack.c.l.b16 %v1682
      %v1735 = vunpack.c.l.b16 %v1683
      %v1736 = vunpack.c.l.b16 %v1684
      %v1737 = vunpack.c.l.b16 %v1685
      %v1738 = vunpack.c.l.b16 %v1686
      %v1739 = vpack.c.b16 %v1724, %v1723
      %v1740 = vpack.c.b16 %v1726, %v1725
      %v1741 = vpack.c.b16 %v1728, %v1727
      %v1742 = vpack.c.b16 %v1730, %v1729
      %v1743 = vpack.c.b16 %v1732, %v1731
      %v1744 = vpack.c.b16 %v1734, %v1733
      %v1745 = vpack.c.b16 %v1736, %v1735
      %v1746 = vpack.c.b16 %v1738, %v1737
      %v1771 = vunpack.c.l.b16 %v1691
      %v1772 = vunpack.c.l.b16 %v1692
      %v1773 = vunpack.c.l.b16 %v1693
      %v1774 = vunpack.c.l.b16 %v1694
      %v1775 = vunpack.c.l.b16 %v1695
      %v1776 = vunpack.c.l.b16 %v1696
      %v1777 = vunpack.c.l.b16 %v1697
      %v1778 = vunpack.c.l.b16 %v1698
      %v1779 = vunpack.c.l.b16 %v1699
      %v1780 = vunpack.c.l.b16 %v1700
      %v1781 = vunpack.c.l.b16 %v1701
      %v1782 = vunpack.c.l.b16 %v1702
      %v1783 = vunpack.c.l.b16 %v1703
      %v1784 = vunpack.c.l.b16 %v1704
      %v1785 = vunpack.c.l.b16 %v1705
      %v1786 = vunpack.c.l.b16 %v1706
      %v1787 = vpack.c.b16 %v1772, %v1771
      %v1788 = vpack.c.b16 %v1774, %v1773
      %v1789 = vpack.c.b16 %v1776, %v1775
      %v1790 = vpack.c.b16 %v1778, %v1777
      %v1791 = vpack.c.b16 %v1780, %v1779
      %v1792 = vpack.c.b16 %v1782, %v1781
      %v1793 = vpack.c.b16 %v1784, %v1783
      %v1794 = vpack.c.b16 %v1786, %v1785
      %1803 = vmatpush.bf16.msra.mxu0 %v1794
      %1804 = vmatpush.bf16.msra.mxu0 %v1793
      %1805 = vmatpush.bf16.msra.mxu0 %v1792
      %1806 = vmatpush.bf16.msra.mxu0 %v1791
      %1807 = vmatpush.bf16.msra.mxu0 %v1790
      %1808 = vmatpush.bf16.msra.mxu0 %v1789
      %1809 = vmatpush.bf16.msra.mxu0 %v1788
      %1810 = vmatpush.bf16.msra.mxu0 %v1787
      %1811 = vmatmul.bf16.gmra.mxu0 %v1739
      %v1812 = vpop.f32.mrf.mxu0
      %v1813 = vadd.f32 0.0, %v1812
      %v1814 = vpop.f32.mrf.mxu0
      %v1815 = vadd.f32 0.0, %v1814
      %1816 = vmatmul.bf16.gmra.mxu0 %v1740
      %v1817 = vpop.f32.mrf.mxu0
      %v1818 = vadd.f32 0.0, %v1817
      %v1819 = vpop.f32.mrf.mxu0
      %v1820 = vadd.f32 0.0, %v1819
      %1821 = vmatmul.bf16.gmra.mxu0 %v1741
      %v1822 = vpop.f32.mrf.mxu0
      %v1823 = vadd.f32 0.0, %v1822
      %v1824 = vpop.f32.mrf.mxu0
      %v1825 = vadd.f32 0.0, %v1824
      %1826 = vmatmul.bf16.gmra.mxu0 %v1742
      %v1827 = vpop.f32.mrf.mxu0
      %v1828 = vadd.f32 0.0, %v1827
      %v1829 = vpop.f32.mrf.mxu0
      %v1830 = vadd.f32 0.0, %v1829
      %1831 = vmatmul.bf16.gmra.mxu0 %v1743
      %v1832 = vpop.f32.mrf.mxu0
      %v1833 = vadd.f32 0.0, %v1832
      %v1834 = vpop.f32.mrf.mxu0
      %v1835 = vadd.f32 0.0, %v1834
      %1836 = vmatmul.bf16.gmra.mxu0 %v1744
      %v1837 = vpop.f32.mrf.mxu0
      %v1838 = vadd.f32 0.0, %v1837
      %v1839 = vpop.f32.mrf.mxu0
      %v1840 = vadd.f32 0.0, %v1839
      %1841 = vmatmul.bf16.gmra.mxu0 %v1745
      %v1842 = vpop.f32.mrf.mxu0
      %v1843 = vadd.f32 0.0, %v1842
      %v1844 = vpop.f32.mrf.mxu0
      %v1845 = vadd.f32 0.0, %v1844
      %1846 = vmatmul.bf16.gmra.mxu0 %v1746
      %v1847 = vpop.f32.mrf.mxu0
      %v1848 = vadd.f32 0.0, %v1847
      %v1849 = vpop.f32.mrf.mxu0
      %v1850 = vadd.f32 0.0, %v1849
      %1851 = vdwg.mxu0
      %v1852 = vadd.f32 %v1655, %v1813
      %v1853 = vadd.f32 %v1656, %v1815
      %v1854 = vadd.f32 %v1657, %v1818
      %v1855 = vadd.f32 %v1658, %v1820
      %v1856 = vadd.f32 %v1659, %v1823
      %v1857 = vadd.f32 %v1660, %v1825
      %v1858 = vadd.f32 %v1661, %v1828
      %v1859 = vadd.f32 %v1662, %v1830
      %v1860 = vadd.f32 %v1663, %v1833
      %v1861 = vadd.f32 %v1664, %v1835
      %v1862 = vadd.f32 %v1665, %v1838
      %v1863 = vadd.f32 %v1666, %v1840
      %v1864 = vadd.f32 %v1667, %v1843
      %v1865 = vadd.f32 %v1668, %v1845
      %v1866 = vadd.f32 %v1669, %v1848
      %v1867 = vadd.f32 %v1670, %v1850
      %1868 = vst [vmem:[#allocation4] sm:$0xff] %v1852
      %1869 = vst [vmem:[#allocation4 + $0x8] sm:$0xff] %v1853
      %1870 = vst [vmem:[#allocation4 + $0x10] sm:$0xff] %v1854
      %1871 = vst [vmem:[#allocation4 + $0x18] sm:$0xff] %v1855
      %1872 = vst [vmem:[#allocation4 + $0x20] sm:$0xff] %v1856
      %1873 = vst [vmem:[#allocation4 + $0x28] sm:$0xff] %v1857
      %1874 = vst [vmem:[#allocation4 + $0x30] sm:$0xff] %v1858
      %1875 = vst [vmem:[#allocation4 + $0x38] sm:$0xff] %v1859
      %1876 = vst [vmem:[#allocation4 + $0x40] sm:$0xff] %v1860
      %1877 = vst [vmem:[#allocation4 + $0x48] sm:$0xff] %v1861
      %1878 = vst [vmem:[#allocation4 + $0x50] sm:$0xff] %v1862
      %1879 = vst [vmem:[#allocation4 + $0x58] sm:$0xff] %v1863
      %1880 = vst [vmem:[#allocation4 + $0x60] sm:$0xff] %v1864
      %1881 = vst [vmem:[#allocation4 + $0x68] sm:$0xff] %v1865
      %1882 = vst [vmem:[#allocation4 + $0x70] sm:$0xff] %v1866
      %1883 = vst [vmem:[#allocation4 + $0x78] sm:$0xff] %v1867
      %p1884 = pnand %p414, %p417
      %p1885 = pneg %p1884
      // Predicated region
      $region69: #{res_gcn_forward.1} parent=55 // pred_check
        _
      $region70: #{res_gcn_forward.1} parent=55 // pred_check_branch
        %1887 = sbr.rel (%p1884) target = $region72
      $region71: #{res_gcn_forward.1} parent=55 // pred_region
        %s1888 = smul.u32 %s29, 128
        %v1889 = vld [vmem:[#allocation4] sm:$0xff]
        %v1890 = vld [vmem:[#allocation4 + $0x8] sm:$0xff]
        %v1891 = vld [vmem:[#allocation4 + $0x10] sm:$0xff]
        %v1892 = vld [vmem:[#allocation4 + $0x18] sm:$0xff]
        %v1893 = vld [vmem:[#allocation4 + $0x20] sm:$0xff]
        %v1894 = vld [vmem:[#allocation4 + $0x28] sm:$0xff]
        %v1895 = vld [vmem:[#allocation4 + $0x30] sm:$0xff]
        %v1896 = vld [vmem:[#allocation4 + $0x38] sm:$0xff]
        %v1897 = vld [vmem:[#allocation4 + $0x40] sm:$0xff]
        %v1898 = vld [vmem:[#allocation4 + $0x48] sm:$0xff]
        %v1899 = vld [vmem:[#allocation4 + $0x50] sm:$0xff]
        %v1900 = vld [vmem:[#allocation4 + $0x58] sm:$0xff]
        %v1901 = vld [vmem:[#allocation4 + $0x60] sm:$0xff]
        %v1902 = vld [vmem:[#allocation4 + $0x68] sm:$0xff]
        %v1903 = vld [vmem:[#allocation4 + $0x70] sm:$0xff]
        %v1904 = vld [vmem:[#allocation4 + $0x78] sm:$0xff]
        %v1905 = vld [vmem:[%s3] sm:$0x1]
        %v1907 = vperm.slane %v1905, 0
        %v1909 = vadd.f32 %v1889, %v1907
        %v1910 = vadd.f32 %v1890, %v1907
        %v1911 = vadd.f32 %v1891, %v1907
        %v1912 = vadd.f32 %v1892, %v1907
        %v1913 = vadd.f32 %v1893, %v1907
        %v1914 = vadd.f32 %v1894, %v1907
        %v1915 = vadd.f32 %v1895, %v1907
        %v1916 = vadd.f32 %v1896, %v1907
        %v1917 = vadd.f32 %v1897, %v1907
        %v1918 = vadd.f32 %v1898, %v1907
        %v1919 = vadd.f32 %v1899, %v1907
        %v1920 = vadd.f32 %v1900, %v1907
        %v1921 = vadd.f32 %v1901, %v1907
        %v1922 = vadd.f32 %v1902, %v1907
        %v1923 = vadd.f32 %v1903, %v1907
        %v1924 = vadd.f32 %v1904, %v1907
        %v1925 = vmax.f32 %v1909, 0.0
        %v1926 = vmax.f32 %v1910, 0.0
        %v1927 = vmax.f32 %v1911, 0.0
        %v1928 = vmax.f32 %v1912, 0.0
        %v1929 = vmax.f32 %v1913, 0.0
        %v1930 = vmax.f32 %v1914, 0.0
        %v1931 = vmax.f32 %v1915, 0.0
        %v1932 = vmax.f32 %v1916, 0.0
        %v1933 = vmax.f32 %v1917, 0.0
        %v1934 = vmax.f32 %v1918, 0.0
        %v1935 = vmax.f32 %v1919, 0.0
        %v1936 = vmax.f32 %v1920, 0.0
        %v1937 = vmax.f32 %v1921, 0.0
        %v1938 = vmax.f32 %v1922, 0.0
        %v1939 = vmax.f32 %v1923, 0.0
        %v1940 = vmax.f32 %v1924, 0.0
        %v1941 = vpack.c.bf16 %v1925, %v1925
        %v1942 = vpack.c.bf16 %v1926, %v1926
        %v1943 = vpack.c.bf16 %v1927, %v1927
        %v1944 = vpack.c.bf16 %v1928, %v1928
        %v1945 = vpack.c.bf16 %v1929, %v1929
        %v1946 = vpack.c.bf16 %v1930, %v1930
        %v1947 = vpack.c.bf16 %v1931, %v1931
        %v1948 = vpack.c.bf16 %v1932, %v1932
        %v1949 = vpack.c.bf16 %v1933, %v1933
        %v1950 = vpack.c.bf16 %v1934, %v1934
        %v1951 = vpack.c.bf16 %v1935, %v1935
        %v1952 = vpack.c.bf16 %v1936, %v1936
        %v1953 = vpack.c.bf16 %v1937, %v1937
        %v1954 = vpack.c.bf16 %v1938, %v1938
        %v1955 = vpack.c.bf16 %v1939, %v1939
        %v1956 = vpack.c.bf16 %v1940, %v1940
        %s1957 = sshra.s32 %s1888, 3
        %s1958 = sand.u32 %s1888, 7
        %s1959 = smul.addr %s1957, 4
        %s1960 = scalar_lea.vmem [#allocation3], %s1959
        %1961 = vst [vmem:[%s1960] sm:$0xf] %v1941
        %1962 = vst [vmem:[%s1960 + $0x4] sm:$0xf] %v1942
        %1963 = vst [vmem:[%s1960 + $0x8] sm:$0xf] %v1943
        %1964 = vst [vmem:[%s1960 + $0xc] sm:$0xf] %v1944
        %1965 = vst [vmem:[%s1960 + $0x10] sm:$0xf] %v1945
        %1966 = vst [vmem:[%s1960 + $0x14] sm:$0xf] %v1946
        %1967 = vst [vmem:[%s1960 + $0x18] sm:$0xf] %v1947
        %1968 = vst [vmem:[%s1960 + $0x1c] sm:$0xf] %v1948
        %1969 = vst [vmem:[%s1960 + $0x20] sm:$0xf] %v1949
        %1970 = vst [vmem:[%s1960 + $0x24] sm:$0xf] %v1950
        %1971 = vst [vmem:[%s1960 + $0x28] sm:$0xf] %v1951
        %1972 = vst [vmem:[%s1960 + $0x2c] sm:$0xf] %v1952
        %1973 = vst [vmem:[%s1960 + $0x30] sm:$0xf] %v1953
        %1974 = vst [vmem:[%s1960 + $0x34] sm:$0xf] %v1954
        %1975 = vst [vmem:[%s1960 + $0x38] sm:$0xf] %v1955
        %1976 = vst [vmem:[%s1960 + $0x3c] sm:$0xf] %v1956
      $region72: #{res_gcn_forward.1} parent=55 // pred_fallthru
        _
      %p1977 = pnand %p414, %p1420
      %p1978 = pneg %p1977
      // Predicated region
      $region73: #{res_gcn_forward.1} parent=55 // pred_check
        _
      $region74: #{res_gcn_forward.1} parent=55 // pred_check_branch
        %1980 = sbr.rel (%p1977) target = $region76
      $region75: #{res_gcn_forward.1} parent=55 // pred_region
        %v1981 = vld [vmem:[#allocation4] sm:$0xff]
        %v1982 = vld [vmem:[#allocation4 + $0x8] sm:$0xff]
        %v1983 = vld [vmem:[#allocation4 + $0x10] sm:$0xff]
        %v1984 = vld [vmem:[#allocation4 + $0x18] sm:$0xff]
        %v1985 = vld [vmem:[#allocation4 + $0x20] sm:$0xff]
        %v1986 = vld [vmem:[#allocation4 + $0x28] sm:$0xff]
        %v1987 = vld [vmem:[#allocation4 + $0x30] sm:$0xff]
        %v1988 = vld [vmem:[#allocation4 + $0x38] sm:$0xff]
        %v1989 = vld [vmem:[#allocation4 + $0x40] sm:$0xff]
        %v1990 = vld [vmem:[#allocation4 + $0x48] sm:$0xff]
        %v1991 = vld [vmem:[#allocation4 + $0x50] sm:$0xff]
        %v1992 = vld [vmem:[#allocation4 + $0x58] sm:$0xff]
        %v1993 = vld [vmem:[#allocation4 + $0x60] sm:$0xff]
        %v1994 = vld [vmem:[#allocation4 + $0x68] sm:$0xff]
        %v1995 = vld [vmem:[#allocation4 + $0x70] sm:$0xff]
        %v1996 = vld [vmem:[#allocation4 + $0x78] sm:$0xff]
        %v1997 = vld [vmem:[%s5] sm:$0x1]
        %v1999 = vperm.slane %v1997, 0
        %v2001 = vadd.f32 %v1981, %v1999
        %v2002 = vadd.f32 %v1982, %v1999
        %v2003 = vadd.f32 %v1983, %v1999
        %v2004 = vadd.f32 %v1984, %v1999
        %v2005 = vadd.f32 %v1985, %v1999
        %v2006 = vadd.f32 %v1986, %v1999
        %v2007 = vadd.f32 %v1987, %v1999
        %v2008 = vadd.f32 %v1988, %v1999
        %v2009 = vadd.f32 %v1989, %v1999
        %v2010 = vadd.f32 %v1990, %v1999
        %v2011 = vadd.f32 %v1991, %v1999
        %v2012 = vadd.f32 %v1992, %v1999
        %v2013 = vadd.f32 %v1993, %v1999
        %v2014 = vadd.f32 %v1994, %v1999
        %v2015 = vadd.f32 %v1995, %v1999
        %v2016 = vadd.f32 %v1996, %v1999
        %v2017 = vmax.f32 %v2001, 0.0
        %v2018 = vmax.f32 %v2002, 0.0
        %v2019 = vmax.f32 %v2003, 0.0
        %v2020 = vmax.f32 %v2004, 0.0
        %v2021 = vmax.f32 %v2005, 0.0
        %v2022 = vmax.f32 %v2006, 0.0
        %v2023 = vmax.f32 %v2007, 0.0
        %v2024 = vmax.f32 %v2008, 0.0
        %v2025 = vmax.f32 %v2009, 0.0
        %v2026 = vmax.f32 %v2010, 0.0
        %v2027 = vmax.f32 %v2011, 0.0
        %v2028 = vmax.f32 %v2012, 0.0
        %v2029 = vmax.f32 %v2013, 0.0
        %v2030 = vmax.f32 %v2014, 0.0
        %v2031 = vmax.f32 %v2015, 0.0
        %v2032 = vmax.f32 %v2016, 0.0
        %v2033 = vpack.c.bf16 %v2018, %v2017
        %v2034 = vpack.c.bf16 %v2020, %v2019
        %v2035 = vpack.c.bf16 %v2022, %v2021
        %v2036 = vpack.c.bf16 %v2024, %v2023
        %v2037 = vpack.c.bf16 %v2026, %v2025
        %v2038 = vpack.c.bf16 %v2028, %v2027
        %v2039 = vpack.c.bf16 %v2030, %v2029
        %v2040 = vpack.c.bf16 %v2032, %v2031
        %v2041 = vlaneseq
        %v2042 = vshrl.u32 %v2041, 7
        %v2043 = vld [vmem:[%s412] sm:$0x1]
        %v2044 = vperm.slane %v2043, 0
        %vm2045 = vcmp.eq.s32.totalorder %v2044, %v2042
        %v2046 = vsel %vm2045, 1, 0
        %v2047 = vcvt.s32.f32 %v2046
        %v2048 = vpack.c.bf16 %v2047, %v2047
        %v2049 = vld [vmem:[#allocation5] sm:$0xff]
        %2050 = vmatpush.bf16.msra.mxu0 %v2040
        %2051 = vmatpush.bf16.msra.mxu0 %v2039
        %2052 = vmatpush.bf16.msra.mxu0 %v2038
        %2053 = vmatpush.bf16.msra.mxu0 %v2037
        %2054 = vmatpush.bf16.msra.mxu0 %v2036
        %2055 = vmatpush.bf16.msra.mxu0 %v2035
        %2056 = vmatpush.bf16.msra.mxu0 %v2034
        %2057 = vmatpush.bf16.msra.mxu0 %v2033
        %2058 = vmatmul.bf16.gmra.mxu0 %v2048
        %v2059 = vpop.f32.mrf.mxu0
        %v2060 = vadd.f32 0.0, %v2059
        %v2061 = vpop.f32.mrf.mxu0
        %2062 = vdwg.mxu0
        %v2063 = vadd.f32 %v2049, %v2060
        %2064 = vst [vmem:[#allocation5] sm:$0xff] %v2063
      $region76: #{res_gcn_forward.1} parent=55 // pred_fallthru
        _
      %p2065 = pnand %p1420, %p413
      %p2066 = pneg %p2065
      %p2067 = pnand %p2066, %p414
      %p2068 = pneg %p2067
      // Predicated region
      $region77: #{res_gcn_forward.1} parent=55 // pred_check
        _
      $region78: #{res_gcn_forward.1} parent=55 // pred_check_branch
        %2070 = sbr.rel (%p2067) target = $region80
      $region79: #{res_gcn_forward.1} parent=55 // pred_region
        %v2071 = vld [vmem:[#allocation5] sm:$0xff]
        %2072 = vst [vmem:[%s9] sm:$0xff] %v2071
        %v2073 = vpack.c.bf16 %v2071, %v2071
        %v2074 = vld [vmem:[%s6] sm:$0xf]
        %v2075 = vld [vmem:[%s6 + $0x4] sm:$0xf]
        %v2076 = vld [vmem:[%s6 + $0x8] sm:$0xf]
        %v2077 = vld [vmem:[%s6 + $0xc] sm:$0xf]
        %v2078 = vld [vmem:[%s6 + $0x10] sm:$0xf]
        %v2079 = vld [vmem:[%s6 + $0x14] sm:$0xf]
        %v2080 = vld [vmem:[%s6 + $0x18] sm:$0xf]
        %v2081 = vld [vmem:[%s6 + $0x1c] sm:$0xf]
        %v2082 = vld [vmem:[%s6 + $0x20] sm:$0xf]
        %v2083 = vld [vmem:[%s6 + $0x24] sm:$0xf]
        %v2084 = vld [vmem:[%s6 + $0x28] sm:$0xf]
        %v2085 = vld [vmem:[%s6 + $0x2c] sm:$0xf]
        %v2086 = vld [vmem:[%s6 + $0x30] sm:$0xf]
        %v2087 = vld [vmem:[%s6 + $0x34] sm:$0xf]
        %v2088 = vld [vmem:[%s6 + $0x38] sm:$0xf]
        %v2089 = vld [vmem:[%s6 + $0x3c] sm:$0xf]
        %v2090 = vld [vmem:[%s7] sm:$0x1]
        %v2092 = vperm.slane %v2090, 0
        %v2110 = vunpack.c.l.b16 %v2074
        %v2111 = vunpack.c.l.b16 %v2075
        %v2112 = vunpack.c.l.b16 %v2076
        %v2113 = vunpack.c.l.b16 %v2077
        %v2114 = vunpack.c.l.b16 %v2078
        %v2115 = vunpack.c.l.b16 %v2079
        %v2116 = vunpack.c.l.b16 %v2080
        %v2117 = vunpack.c.l.b16 %v2081
        %v2118 = vunpack.c.l.b16 %v2082
        %v2119 = vunpack.c.l.b16 %v2083
        %v2120 = vunpack.c.l.b16 %v2084
        %v2121 = vunpack.c.l.b16 %v2085
        %v2122 = vunpack.c.l.b16 %v2086
        %v2123 = vunpack.c.l.b16 %v2087
        %v2124 = vunpack.c.l.b16 %v2088
        %v2125 = vunpack.c.l.b16 %v2089
        %v2126 = vpack.c.b16 %v2111, %v2110
        %v2127 = vpack.c.b16 %v2113, %v2112
        %v2128 = vpack.c.b16 %v2115, %v2114
        %v2129 = vpack.c.b16 %v2117, %v2116
        %v2130 = vpack.c.b16 %v2119, %v2118
        %v2131 = vpack.c.b16 %v2121, %v2120
        %v2132 = vpack.c.b16 %v2123, %v2122
        %v2133 = vpack.c.b16 %v2125, %v2124
        %2142 = vmatpush.bf16.msra.mxu0 %v2133
        %2143 = vmatpush.bf16.msra.mxu0 %v2132
        %2144 = vmatpush.bf16.msra.mxu0 %v2131
        %2145 = vmatpush.bf16.msra.mxu0 %v2130
        %2146 = vmatpush.bf16.msra.mxu0 %v2129
        %2147 = vmatpush.bf16.msra.mxu0 %v2128
        %2148 = vmatpush.bf16.msra.mxu0 %v2127
        %2149 = vmatpush.bf16.msra.mxu0 %v2126
        %2150 = vmatmul.bf16.gmra.mxu0 %v2073
        %v2151 = vpop.f32.mrf.mxu0
        %v2152 = vadd.f32 %v2092, %v2151
        %v2153 = vpop.f32.mrf.mxu0
        %2154 = vdwg.mxu0
        %2155 = vst [vmem:[%s10] sm:$0xff] %v2152
        %2156 = vmax.xlane.f32.xlu0 %v2152
        %v2157 = vpop.xlane.xlu0 %2156
        %v2158 = vsub.f32 %v2152, %v2157
        %v2159 = vmul.f32 %v2158, 1.442695
        %v2160 = vpow.pop %v2159
        %2161 = vadd.xlane.f32.xlu0 %v2160
        %v2162 = vpop.xlane.xlu0 %2161
        %v2163 = vlog2.pop %v2162
        %v2164 = vmul.f32 %v2163, 0.6931472
        %v2165 = vsub.f32 %v2158, %v2164
        %2166 = vst [vmem:[%s11] sm:$0xff] %v2165
      $region80: #{res_gcn_forward.1} parent=55 // pred_fallthru
        _
      // Predicated region
      $region81: #{res_gcn_forward.1} parent=55 // pred_check
        %p2167 = pneg %p256
      $region82: #{res_gcn_forward.1} parent=55 // pred_check_branch
        %2169 = sbr.rel (%p2167) target = $region84
      $region83: #{res_gcn_forward.1} parent=55 // pred_region
        _
      $region84: #{res_gcn_forward.1} parent=55 // pred_fallthru
        _
      // Predicated region
      $region85: #{res_gcn_forward.1} parent=55 // pred_check
        %p2170 = pneg %p277
      $region86: #{res_gcn_forward.1} parent=55 // pred_check_branch
        %2172 = sbr.rel (%p2170) target = $region88
      $region87: #{res_gcn_forward.1} parent=55 // pred_region
        _
      $region88: #{res_gcn_forward.1} parent=55 // pred_fallthru
        _
      // Predicated region
      $region89: #{res_gcn_forward.1} parent=55 // pred_check
        %p2173 = pneg %p298
      $region90: #{res_gcn_forward.1} parent=55 // pred_check_branch
        %2175 = sbr.rel (%p2173) target = $region92
      $region91: #{res_gcn_forward.1} parent=55 // pred_region
        _
      $region92: #{res_gcn_forward.1} parent=55 // pred_fallthru
        _
      // Predicated region
      $region93: #{res_gcn_forward.1} parent=55 // pred_check
        %p2176 = pneg %p256
      $region94: #{res_gcn_forward.1} parent=55 // pred_check_branch
        %2178 = sbr.rel (%p2176) target = $region96
      $region95: #{res_gcn_forward.1} parent=55 // pred_region
        _
      $region96: #{res_gcn_forward.1} parent=55 // pred_fallthru
        _
      // Predicated region
      $region97: #{res_gcn_forward.1} parent=55 // pred_check
        %p2179 = pneg %p277
      $region98: #{res_gcn_forward.1} parent=55 // pred_check_branch
        %2181 = sbr.rel (%p2179) target = $region100
      $region99: #{res_gcn_forward.1} parent=55 // pred_region
        _
      $region100: #{res_gcn_forward.1} parent=55 // pred_fallthru
        _
      // Predicated region
      $region101: #{res_gcn_forward.1} parent=55 // pred_check
        %p2182 = pneg %p298
      $region102: #{res_gcn_forward.1} parent=55 // pred_check_branch
        %2184 = sbr.rel (%p2182) target = $region104
      $region103: #{res_gcn_forward.1} parent=55 // pred_region
        _
      $region104: #{res_gcn_forward.1} parent=55 // pred_fallthru
        _
    $region56: #{res_gcn_forward.1} parent=5 // pred_fallthru
      _
    %p2185 = scmp.le.s32.totalorder 2, %s18
    // Predicated region
    $region105: #{res_gcn_forward.1} parent=5 // pred_check
      %p2186 = pneg %p2185
    $region106: #{res_gcn_forward.1} parent=5 // pred_check_branch
      %2188 = sbr.rel (%p2186) target = $region108
    $region107: #{res_gcn_forward.1} parent=5 // pred_region
      %s2189 = ssub.s32 %s18, 2
    $region108: #{res_gcn_forward.1} parent=5 // pred_fallthru
      _
  $region6: #{res_gcn_forward.1} parent=0 // loop_footer
    %s22 = sadd.s32 1, %s18
  $region7: #{res_gcn_forward.1} parent=0 // loop_footer_branch
    %17 = sbr.rel target = $region3
  $region8: #{res_gcn_forward.1} parent=0 // loop_exit
    _

</llo_original>
